<compile_context>
chip_gen: v7x
topology: tpu7x:2x2x1
jax: 0.10.0
libtpu: 0.0.40
codegen_flags: <defaults>
</compile_context>

<pallas_src>
import functools
import math
from dataclasses import dataclass

import numpy as np
import jax
import jax.numpy as jnp
from jax import lax
from jax.experimental import pallas as pl
from jax.experimental.pallas import tpu as pltpu


@dataclass
class ClusterConfig:
    min_points: int = 10
    max_points: int = 10000
    distance_threshold: float = 0.5
    cluster_radius: float = 1.0
    min_cluster_size: int = 50
    max_cluster_size: int = 5000


MAX_POINTS_PER_VOXEL = 32
_LANE = 128
_MAX_N_PAD = 4096          # single-kernel ceiling with bf16-resident reach


def _pow2_bucket(n: int) -> int:
    p = _LANE
    while p < n:
        p *= 2
    return p


def _vmem_limit_bytes() -> int:
    # Generation-aware VMEM limit: v4/v5/v6 have 128 MiB/core, v7x 64 MiB/TC.
    try:
        kind = jax.devices()[0].device_kind.lower()
    except Exception:
        kind = ""
    if any(tag in kind for tag in ("v4", "v5", "v6")):
        return 100 * 1024 * 1024
    return 56 * 1024 * 1024


# -----------------------------------------------------------------------------
# Pallas kernel 1: adjacency + connected-component labels.
#   reach (bf16, VMEM scratch) = adjacency; log2(n_pad) thresholded squarings on
#   the MXU (bf16 in, f32 accumulate); label[j] = min voxel index reachable.
#   All phases row-tiled (TM) so temporaries stay bounded.
# -----------------------------------------------------------------------------
def _cluster_label_kernel(cc_ref, cr_ref, labels_ref, reach_ref, *,
                          radius_sq, n_iters, tm):
    n_pad = cc_ref.shape[0]
    n_tiles = n_pad // tm
    one = jnp.float32(1.0)
    zero = jnp.float32(0.0)
    big = jnp.float32(n_pad)

    cr = cr_ref[...]                                   # (8, n_pad) f32, small

    # ---- adjacency incl. self loops, row tile at a time, stored bf16 ----------
    for t in range(n_tiles):
        r0 = t * tm
        cc_tile = cc_ref[r0:r0 + tm, :]                # (tm, 8)
        dist = jnp.zeros((tm, n_pad), jnp.float32)
        for d in range(3):
            diff = cc_tile[:, d:d + 1] - cr[d:d + 1, :]
            dist = dist + diff * diff
        adj = jnp.where(dist <= radius_sq, one, zero)
        reach_ref[r0:r0 + tm, :] = adj.astype(jnp.bfloat16)

    # ---- transitive closure by repeated squaring (bf16 resident) --------------
    # In-place row-tile updates (Gauss-Seidel) are safe: reach is monotone
    # non-decreasing and every 1 corresponds to a real path, so convergence is
    # at least as fast as the Jacobi update; n_iters (2^n_iters >= n_pad hops)
    # always suffices.
    for _ in range(n_iters):
        for t in range(n_tiles):
            r0 = t * tm
            lhs = reach_ref[r0:r0 + tm, :]             # (tm, n_pad) bf16
            prod = jnp.dot(lhs, reach_ref[...],
                           preferred_element_type=jnp.float32)
            reach_ref[r0:r0 + tm, :] = (
                jnp.where(prod > zero, one, zero).astype(jnp.bfloat16))

    # ---- labels = min voxel index reachable (blocked column-min epilogue) -----
    run_min = jnp.full((1, n_pad), big, jnp.float32)
    for t in range(n_tiles):
        r0 = t * tm
        blk = reach_ref[r0:r0 + tm, :].astype(jnp.float32)
        ii = (lax.broadcasted_iota(jnp.int32, (tm, n_pad), 0) + r0
              ).astype(jnp.float32)
        cand = jnp.where(blk > zero, ii, big)
        run_min = jnp.minimum(run_min, jnp.min(cand, axis=0, keepdims=True))
    labels_ref[...] = run_min.astype(jnp.int32)


def cluster_labels_call(cc_dev, cr_dev, n_pad, radius_sq, n_iters, vmem_limit):
    tm = min(512, n_pad)
    return pl.pallas_call(
        functools.partial(_cluster_label_kernel,
                          radius_sq=float(radius_sq),
                          n_iters=int(n_iters), tm=tm),
        out_shape=jax.ShapeDtypeStruct((1, n_pad), jnp.int32),
        grid=(1,),
        in_specs=[pl.BlockSpec((n_pad, 8), lambda i: (0, 0)),
                  pl.BlockSpec((8, n_pad), lambda i: (0, 0))],
        out_specs=pl.BlockSpec((1, n_pad), lambda i: (0, 0)),
        scratch_shapes=[pltpu.VMEM((n_pad, n_pad), jnp.bfloat16)],
        compiler_params=pltpu.CompilerParams(
            dimension_semantics=("arbitrary",),
            vmem_limit_bytes=vmem_limit),
    )(cc_dev, cr_dev)


# -----------------------------------------------------------------------------
# Pallas kernel 2: per-cluster stats, K tiled with a 'parallel' grid axis.
#   Consumes the (min-index) labels directly from kernel 1 (K = n_pad columns);
#   one-hot is built in-kernel per K tile; output lane-dense (8, TK):
#     row 0     = cluster size (32 per voxel, matching the reference's zero pad)
#     rows 1..3 = per-cluster xyz sums
# -----------------------------------------------------------------------------
def _cluster_stats_kernel(labels_ref, feat_t_ref, out_ref):
    lab = labels_ref[...]                                    # (n_pad, 1) int32
    n_pad = lab.shape[0]
    tk = out_ref.shape[1]
    base = pl.program_id(0) * tk
    cls = lax.broadcasted_iota(jnp.int32, (n_pad, tk), 1) + base
    onehot = (lab == cls).astype(jnp.float32)                # (n_pad, tk)
    out_ref[...] = jnp.dot(feat_t_ref[...], onehot,
                           preferred_element_type=jnp.float32)


def cluster_stats_call(labels_col_dev, feat_t_dev, n_pad, vmem_limit):
    tk = min(512, n_pad)
    return pl.pallas_call(
        _cluster_stats_kernel,
        out_shape=jax.ShapeDtypeStruct((8, n_pad), jnp.float32),
        grid=(n_pad // tk,),
        in_specs=[pl.BlockSpec((n_pad, 1), lambda j: (0, 0)),
                  pl.BlockSpec((8, n_pad), lambda j: (0, 0))],
        out_specs=pl.BlockSpec((8, tk), lambda j: (0, j)),
        compiler_params=pltpu.CompilerParams(
            dimension_semantics=("parallel",),
            vmem_limit_bytes=vmem_limit),
    )(labels_col_dev, feat_t_dev)


# -----------------------------------------------------------------------------
# Host glue: voxelization (matches GPUVoxelGrid.voxelize, dynamic shapes + loop)
# -----------------------------------------------------------------------------
def voxelize_np(points, voxel_size, max_points_per_voxel):
    coords = np.floor(points[:, :3] / voxel_size).astype(np.int32)
    unq, inverse, counts = np.unique(coords, axis=0,
                                     return_inverse=True, return_counts=True)
    inverse = np.asarray(inverse).reshape(-1)
    m = unq.shape[0]
    voxels = np.zeros((m, max_points_per_voxel, points.shape[1]), dtype=np.float32)
    num_points = np.zeros((m,), dtype=np.float32)
    for i, vidx in enumerate(inverse):
        if num_points[vidx] < max_points_per_voxel:
            voxels[vidx, int(num_points[vidx])] = points[i]
            num_points[vidx] += 1
    return voxels, unq, num_points


# -----------------------------------------------------------------------------
# forward() equivalent
# -----------------------------------------------------------------------------
def cuda_clustering_forward(points, config: ClusterConfig):
    points = np.asarray(points, dtype=np.float32)
    voxel_size = config.distance_threshold

    voxels, coords, num_points = voxelize_np(points, voxel_size, MAX_POINTS_PER_VOXEL)
    valid_mask = num_points >= config.min_points
    valid_voxels = voxels[valid_mask]                                   # (Nv, 32, D)
    valid_coords = coords[valid_mask].astype(np.float32)                # (Nv, 3)
    n = int(valid_coords.shape[0])

    if n == 0:
        return {"cluster_labels": jnp.zeros((0,), jnp.int32),
                "cluster_centers": jnp.zeros((0, 3), jnp.float32),
                "cluster_sizes": jnp.zeros((0,), jnp.float32),
                "valid_clusters": jnp.zeros((0,), bool)}

    # NOTE: int() truncation intentionally matches the reference
    # (`radius = int(cluster_radius / voxel_size)`).
    radius = int(config.cluster_radius / voxel_size)
    radius_sq = float(radius * radius)

    # power-of-two bucketing of n_pad (and n_iters) so the unrolled kernel is
    # compile-cached across voxel counts.
    n_pad = _pow2_bucket(n)
    if n_pad > _MAX_N_PAD:
        # TODO(synk): HBM ping-pong tiling of reach for very large voxel counts.
        raise NotImplementedError(
            f"{n} valid voxels exceeds the single-kernel VMEM ceiling "
            f"(n_pad={n_pad} > {_MAX_N_PAD})")
    # 2^n_iters hops >= n_pad >= worst-case component diameter (n-1).
    # (A purely geometric diameter bound is NOT safe for serpentine components,
    #  so we keep the log2(n_pad) bound for correctness.)
    n_iters = max(1, int(round(math.log2(n_pad))))
    vmem_limit = _vmem_limit_bytes()

    # coords in both layouts.  Padded voxels get strictly isolated coordinates
    # (> radius away from everything) so each is its own singleton component.
    step = float(radius + 1)
    base = float(valid_coords.max()) + step
    cc = np.zeros((n_pad, 8), np.float32)
    cc[:n, :3] = valid_coords
    if n_pad > n:
        far = base + step * np.arange(1, n_pad - n + 1, dtype=np.float32)
        cc[n:, 0] = far
        cc[n:, 1] = far
        cc[n:, 2] = far
    cr = np.ascontiguousarray(cc.T)                                     # (8, n_pad)

    # per-voxel features for kernel 2 (independent of labels -> both kernels can
    # be dispatched back-to-back with a single final D2H sync).
    xyz_sums = valid_voxels[:, :, :3].sum(axis=1).astype(np.float32)    # (Nv, 3)
    feat_t = np.zeros((8, n_pad), np.float32)
    feat_t[0, :n] = float(MAX_POINTS_PER_VOXEL)   # reference counts zero-padded slots
    feat_t[1:4, :n] = xyz_sums.T

    # --- Pallas kernel 1: adjacency + connected components (min-index labels) --
    labels_dev = cluster_labels_call(jnp.asarray(cc), jnp.asarray(cr),
                                     n_pad, radius_sq, n_iters, vmem_limit)

    # --- Pallas kernel 2: cluster sizes + xyz sums, keyed by min-index label ---
    labels_col_dev = labels_dev.reshape((n_pad, 1))
    stats_dev = cluster_stats_call(labels_col_dev, jnp.asarray(feat_t),
                                   n_pad, vmem_limit)

    # --- single host sync + dense rank / compaction (dynamic shapes) -----------
    labels_host = np.asarray(labels_dev)[0, :n]
    stats_host = np.asarray(stats_dev)                                  # (8, n_pad)

    uniq = np.unique(labels_host)                       # sorted min-index roots
    cluster_labels = np.searchsorted(uniq, labels_host).astype(np.int32)

    cluster_sizes = stats_host[0, uniq].astype(np.float32)
    # reference mean includes zero-padded point slots -> divide xyz sums by size
    cluster_centers = stats_host[1:4, uniq].T / cluster_sizes[:, None]

    valid_clusters = ((cluster_sizes >= config.min_cluster_size) &
                      (cluster_sizes <= config.max_cluster_size))

    return {
        "cluster_labels": jnp.asarray(cluster_labels),
        "cluster_centers": jnp.asarray(cluster_centers[valid_clusters]),
        "cluster_sizes": jnp.asarray(cluster_sizes[valid_clusters]),
        "valid_clusters": jnp.asarray(valid_clusters),
    }


# -----------------------------------------------------------------------------
# Example
# -----------------------------------------------------------------------------
def _make_blob(key, center, n):
    kxyz, kint = jax.random.split(key)
    xyz = jnp.asarray(center, jnp.float32)[None, :] + \
        jax.random.uniform(kxyz, (n, 3), minval=-0.2, maxval=0.2)
    intensity = jax.random.uniform(kint, (n, 1))
    return jnp.concatenate([xyz, intensity], axis=1)


if __name__ == "__main__":
    config = ClusterConfig()
    key = jax.random.PRNGKey(0)

    blob_specs = [
        # cluster A: two adjacent voxels (0,0,0), (1,0,0) -> size 64 (valid)
        ((0.25, 0.25, 0.25), 16), ((0.75, 0.25, 0.25), 16),
        # cluster B: three adjacent voxels (8,8,0), (9,8,0), (8,9,0) -> size 96 (valid)
        ((4.25, 4.25, 0.25), 12), ((4.75, 4.25, 0.25), 12), ((4.25, 4.75, 0.25), 12),
        # cluster C: isolated voxel (20,20,10) -> size 32 (< min_cluster_size, filtered)
        ((10.25, 10.25, 5.25), 16),
        # sparse noise: voxels with 1 point each -> removed by min_points
        ((-3.2, 7.3, -5.1), 1), ((-7.6, 12.4, -9.9), 1), ((13.6, -6.2, 3.3), 1),
        ((-15.1, -8.7, 6.6), 1), ((17.9, 2.2, -12.4), 1), ((6.1, -14.3, 9.8), 1),
    ]
    keys = jax.random.split(key, len(blob_specs))
    points = jnp.concatenate(
        [_make_blob(k, c, n) for k, (c, n) in zip(keys, blob_specs)], axis=0)  # (90, 4)

    out = cuda_clustering_forward(points, config)
    out = jax.block_until_ready(out)

    # sanity checks on the deterministic example
    assert out["cluster_labels"].shape[0] == 6
    assert int(jnp.max(out["cluster_labels"])) + 1 == 3
    assert out["cluster_centers"].shape == (2, 3)
    assert out["cluster_sizes"].shape == (2,)
    assert bool(jnp.all(out["cluster_sizes"] >= config.min_cluster_size))

    print("KERNEL_OK")
</pallas_src>

<mosaic_0001>
module attributes {stable_mosaic.version = 11 : i64} {
  func.func @_cluster_label_kernel(%arg0: i32, %arg1: memref<128x8xf32, #tpu.memory_space<vmem>>, %arg2: memref<8x128xf32, #tpu.memory_space<vmem>>, %arg3: memref<1x128xi32, #tpu.memory_space<vmem>>, %arg4: memref<128x128xbf16, #tpu.memory_space<vmem>>) attributes {dimension_semantics = [#tpu.dimension_semantics<arbitrary>], iteration_bounds = array<i64: 1>, scalar_prefetch = 0 : i64, scratch_operands = 1 : i64, tpu.core_type = #tpu.core_type<tc>, window_params = [{pipeline_mode = #tpu.pipeline_mode<synchronous>, transform_indices = @transform_0, window_bounds = array<i64: 128, 8>}, {pipeline_mode = #tpu.pipeline_mode<synchronous>, transform_indices = @transform_1, window_bounds = array<i64: 8, 128>}, {pipeline_mode = #tpu.pipeline_mode<synchronous>, transform_indices = @transform_2, window_bounds = array<i64: 1, 128>}]} {
    %c0 = arith.constant 0 : index
    %c0_0 = arith.constant 0 : index
    %0 = vector.load %arg2[%c0, %c0_0] : memref<8x128xf32, #tpu.memory_space<vmem>>, vector<8x128xf32>
    %c0_1 = arith.constant 0 : index
    %c0_2 = arith.constant 0 : index
    %1 = vector.load %arg1[%c0_1, %c0_2] : memref<128x8xf32, #tpu.memory_space<vmem>>, vector<128x8xf32>
    %cst = arith.constant 0.000000e+00 : f32
    %2 = vector.broadcast %cst : f32 to vector<128x128xf32>
    %3 = vector.extract_strided_slice %1 {offsets = [0, 0], sizes = [128, 1], strides = [1, 1]} : vector<128x8xf32> to vector<128x1xf32>
    %4 = vector.extract_strided_slice %0 {offsets = [0, 0], sizes = [1, 128], strides = [1, 1]} : vector<8x128xf32> to vector<1x128xf32>
    %5 = vector.broadcast %3 : vector<128x1xf32> to vector<128x128xf32>
    %6 = vector.broadcast %4 : vector<1x128xf32> to vector<128x128xf32>
    %7 = arith.subf %5, %6 : vector<128x128xf32>
    %8 = arith.mulf %7, %7 : vector<128x128xf32>
    %9 = arith.addf %2, %8 : vector<128x128xf32>
    %10 = vector.extract_strided_slice %1 {offsets = [0, 1], sizes = [128, 1], strides = [1, 1]} : vector<128x8xf32> to vector<128x1xf32>
    %11 = vector.extract_strided_slice %0 {offsets = [1, 0], sizes = [1, 128], strides = [1, 1]} : vector<8x128xf32> to vector<1x128xf32>
    %12 = vector.broadcast %10 : vector<128x1xf32> to vector<128x128xf32>
    %13 = vector.broadcast %11 : vector<1x128xf32> to vector<128x128xf32>
    %14 = arith.subf %12, %13 : vector<128x128xf32>
    %15 = arith.mulf %14, %14 : vector<128x128xf32>
    %16 = arith.addf %9, %15 : vector<128x128xf32>
    %17 = vector.extract_strided_slice %1 {offsets = [0, 2], sizes = [128, 1], strides = [1, 1]} : vector<128x8xf32> to vector<128x1xf32>
    %18 = vector.extract_strided_slice %0 {offsets = [2, 0], sizes = [1, 128], strides = [1, 1]} : vector<8x128xf32> to vector<1x128xf32>
    %19 = vector.broadcast %17 : vector<128x1xf32> to vector<128x128xf32>
    %20 = vector.broadcast %18 : vector<1x128xf32> to vector<128x128xf32>
    %21 = arith.subf %19, %20 : vector<128x128xf32>
    %22 = arith.mulf %21, %21 : vector<128x128xf32>
    %23 = arith.addf %16, %22 : vector<128x128xf32>
    %cst_3 = arith.constant 4.000000e+00 : f32
    %24 = vector.broadcast %cst_3 : f32 to vector<128x128xf32>
    %25 = arith.cmpf ole, %23, %24 : vector<128x128xf32>
    %cst_4 = arith.constant 1.000000e+00 : f32
    %cst_5 = arith.constant 0.000000e+00 : f32
    %26 = vector.broadcast %cst_4 : f32 to vector<128x128xf32>
    %27 = vector.broadcast %cst_5 : f32 to vector<128x128xf32>
    %28 = arith.select %25, %26, %27 : vector<128x128xi1>, vector<128x128xf32>
    %29 = arith.truncf %28 : vector<128x128xf32> to vector<128x128xbf16>
    %c0_6 = arith.constant 0 : index
    %c0_7 = arith.constant 0 : index
    %30 = vector.load %arg4[%c0_6, %c0_7] : memref<128x128xbf16, #tpu.memory_space<vmem>>, vector<128x128xbf16>
    tpu.vector_store %arg4[%c0_6, %c0_7], %29 {strides = array<i32>} : memref<128x128xbf16, #tpu.memory_space<vmem>>, vector<128x128xbf16>,
    %c0_8 = arith.constant 0 : index
    %c0_9 = arith.constant 0 : index
    %31 = vector.load %arg4[%c0_8, %c0_9] : memref<128x128xbf16, #tpu.memory_space<vmem>>, vector<128x128xbf16>
    %c0_10 = arith.constant 0 : index
    %c0_11 = arith.constant 0 : index
    %32 = vector.load %arg4[%c0_10, %c0_11] : memref<128x128xbf16, #tpu.memory_space<vmem>>, vector<128x128xbf16>
    %cst_12 = arith.constant dense<0.000000e+00> : vector<128x128xf32>
    %33 = tpu.matmul %31, %32, %cst_12 {dimension_numbers = #tpu.dot_dimension_numbers<[1], [0], [0], [1], [0, 0, 1, 1], [], []>} : vector<128x128xbf16>, vector<128x128xbf16>, vector<128x128xf32> -> vector<128x128xf32>
    %cst_13 = arith.constant 0.000000e+00 : f32
    %34 = vector.broadcast %cst_13 : f32 to vector<128x128xf32>
    %35 = arith.cmpf ogt, %33, %34 : vector<128x128xf32>
    %cst_14 = arith.constant 1.000000e+00 : f32
    %cst_15 = arith.constant 0.000000e+00 : f32
    %36 = vector.broadcast %cst_14 : f32 to vector<128x128xf32>
    %37 = vector.broadcast %cst_15 : f32 to vector<128x128xf32>
    %38 = arith.select %35, %36, %37 : vector<128x128xi1>, vector<128x128xf32>
    %39 = arith.truncf %38 : vector<128x128xf32> to vector<128x128xbf16>
    %c0_16 = arith.constant 0 : index
    %c0_17 = arith.constant 0 : index
    %40 = vector.load %arg4[%c0_16, %c0_17] : memref<128x128xbf16, #tpu.memory_space<vmem>>, vector<128x128xbf16>
    tpu.vector_store %arg4[%c0_16, %c0_17], %39 {strides = array<i32>} : memref<128x128xbf16, #tpu.memory_space<vmem>>, vector<128x128xbf16>,
    %c0_18 = arith.constant 0 : index
    %c0_19 = arith.constant 0 : index
    %41 = vector.load %arg4[%c0_18, %c0_19] : memref<128x128xbf16, #tpu.memory_space<vmem>>, vector<128x128xbf16>
    %c0_20 = arith.constant 0 : index
    %c0_21 = arith.constant 0 : index
    %42 = vector.load %arg4[%c0_20, %c0_21] : memref<128x128xbf16, #tpu.memory_space<vmem>>, vector<128x128xbf16>
    %cst_22 = arith.constant dense<0.000000e+00> : vector<128x128xf32>
    %43 = tpu.matmul %41, %42, %cst_22 {dimension_numbers = #tpu.dot_dimension_numbers<[1], [0], [0], [1], [0, 0, 1, 1], [], []>} : vector<128x128xbf16>, vector<128x128xbf16>, vector<128x128xf32> -> vector<128x128xf32>
    %cst_23 = arith.constant 0.000000e+00 : f32
    %44 = vector.broadcast %cst_23 : f32 to vector<128x128xf32>
    %45 = arith.cmpf ogt, %43, %44 : vector<128x128xf32>
    %cst_24 = arith.constant 1.000000e+00 : f32
    %cst_25 = arith.constant 0.000000e+00 : f32
    %46 = vector.broadcast %cst_24 : f32 to vector<128x128xf32>
    %47 = vector.broadcast %cst_25 : f32 to vector<128x128xf32>
    %48 = arith.select %45, %46, %47 : vector<128x128xi1>, vector<128x128xf32>
    %49 = arith.truncf %48 : vector<128x128xf32> to vector<128x128xbf16>
    %c0_26 = arith.constant 0 : index
    %c0_27 = arith.constant 0 : index
    %50 = vector.load %arg4[%c0_26, %c0_27] : memref<128x128xbf16, #tpu.memory_space<vmem>>, vector<128x128xbf16>
    tpu.vector_store %arg4[%c0_26, %c0_27], %49 {strides = array<i32>} : memref<128x128xbf16, #tpu.memory_space<vmem>>, vector<128x128xbf16>,
    %c0_28 = arith.constant 0 : index
    %c0_29 = arith.constant 0 : index
    %51 = vector.load %arg4[%c0_28, %c0_29] : memref<128x128xbf16, #tpu.memory_space<vmem>>, vector<128x128xbf16>
    %c0_30 = arith.constant 0 : index
    %c0_31 = arith.constant 0 : index
    %52 = vector.load %arg4[%c0_30, %c0_31] : memref<128x128xbf16, #tpu.memory_space<vmem>>, vector<128x128xbf16>
    %cst_32 = arith.constant dense<0.000000e+00> : vector<128x128xf32>
    %53 = tpu.matmul %51, %52, %cst_32 {dimension_numbers = #tpu.dot_dimension_numbers<[1], [0], [0], [1], [0, 0, 1, 1], [], []>} : vector<128x128xbf16>, vector<128x128xbf16>, vector<128x128xf32> -> vector<128x128xf32>
    %cst_33 = arith.constant 0.000000e+00 : f32
    %54 = vector.broadcast %cst_33 : f32 to vector<128x128xf32>
    %55 = arith.cmpf ogt, %53, %54 : vector<128x128xf32>
    %cst_34 = arith.constant 1.000000e+00 : f32
    %cst_35 = arith.constant 0.000000e+00 : f32
    %56 = vector.broadcast %cst_34 : f32 to vector<128x128xf32>
    %57 = vector.broadcast %cst_35 : f32 to vector<128x128xf32>
    %58 = arith.select %55, %56, %57 : vector<128x128xi1>, vector<128x128xf32>
    %59 = arith.truncf %58 : vector<128x128xf32> to vector<128x128xbf16>
    %c0_36 = arith.constant 0 : index
    %c0_37 = arith.constant 0 : index
    %60 = vector.load %arg4[%c0_36, %c0_37] : memref<128x128xbf16, #tpu.memory_space<vmem>>, vector<128x128xbf16>
    tpu.vector_store %arg4[%c0_36, %c0_37], %59 {strides = array<i32>} : memref<128x128xbf16, #tpu.memory_space<vmem>>, vector<128x128xbf16>,
    %c0_38 = arith.constant 0 : index
    %c0_39 = arith.constant 0 : index
    %61 = vector.load %arg4[%c0_38, %c0_39] : memref<128x128xbf16, #tpu.memory_space<vmem>>, vector<128x128xbf16>
    %c0_40 = arith.constant 0 : index
    %c0_41 = arith.constant 0 : index
    %62 = vector.load %arg4[%c0_40, %c0_41] : memref<128x128xbf16, #tpu.memory_space<vmem>>, vector<128x128xbf16>
    %cst_42 = arith.constant dense<0.000000e+00> : vector<128x128xf32>
    %63 = tpu.matmul %61, %62, %cst_42 {dimension_numbers = #tpu.dot_dimension_numbers<[1], [0], [0], [1], [0, 0, 1, 1], [], []>} : vector<128x128xbf16>, vector<128x128xbf16>, vector<128x128xf32> -> vector<128x128xf32>
    %cst_43 = arith.constant 0.000000e+00 : f32
    %64 = vector.broadcast %cst_43 : f32 to vector<128x128xf32>
    %65 = arith.cmpf ogt, %63, %64 : vector<128x128xf32>
    %cst_44 = arith.constant 1.000000e+00 : f32
    %cst_45 = arith.constant 0.000000e+00 : f32
    %66 = vector.broadcast %cst_44 : f32 to vector<128x128xf32>
    %67 = vector.broadcast %cst_45 : f32 to vector<128x128xf32>
    %68 = arith.select %65, %66, %67 : vector<128x128xi1>, vector<128x128xf32>
    %69 = arith.truncf %68 : vector<128x128xf32> to vector<128x128xbf16>
    %c0_46 = arith.constant 0 : index
    %c0_47 = arith.constant 0 : index
    %70 = vector.load %arg4[%c0_46, %c0_47] : memref<128x128xbf16, #tpu.memory_space<vmem>>, vector<128x128xbf16>
    tpu.vector_store %arg4[%c0_46, %c0_47], %69 {strides = array<i32>} : memref<128x128xbf16, #tpu.memory_space<vmem>>, vector<128x128xbf16>,
    %c0_48 = arith.constant 0 : index
    %c0_49 = arith.constant 0 : index
    %71 = vector.load %arg4[%c0_48, %c0_49] : memref<128x128xbf16, #tpu.memory_space<vmem>>, vector<128x128xbf16>
    %c0_50 = arith.constant 0 : index
    %c0_51 = arith.constant 0 : index
    %72 = vector.load %arg4[%c0_50, %c0_51] : memref<128x128xbf16, #tpu.memory_space<vmem>>, vector<128x128xbf16>
    %cst_52 = arith.constant dense<0.000000e+00> : vector<128x128xf32>
    %73 = tpu.matmul %71, %72, %cst_52 {dimension_numbers = #tpu.dot_dimension_numbers<[1], [0], [0], [1], [0, 0, 1, 1], [], []>} : vector<128x128xbf16>, vector<128x128xbf16>, vector<128x128xf32> -> vector<128x128xf32>
    %cst_53 = arith.constant 0.000000e+00 : f32
    %74 = vector.broadcast %cst_53 : f32 to vector<128x128xf32>
    %75 = arith.cmpf ogt, %73, %74 : vector<128x128xf32>
    %cst_54 = arith.constant 1.000000e+00 : f32
    %cst_55 = arith.constant 0.000000e+00 : f32
    %76 = vector.broadcast %cst_54 : f32 to vector<128x128xf32>
    %77 = vector.broadcast %cst_55 : f32 to vector<128x128xf32>
    %78 = arith.select %75, %76, %77 : vector<128x128xi1>, vector<128x128xf32>
    %79 = arith.truncf %78 : vector<128x128xf32> to vector<128x128xbf16>
    %c0_56 = arith.constant 0 : index
    %c0_57 = arith.constant 0 : index
    %80 = vector.load %arg4[%c0_56, %c0_57] : memref<128x128xbf16, #tpu.memory_space<vmem>>, vector<128x128xbf16>
    tpu.vector_store %arg4[%c0_56, %c0_57], %79 {strides = array<i32>} : memref<128x128xbf16, #tpu.memory_space<vmem>>, vector<128x128xbf16>,
    %c0_58 = arith.constant 0 : index
    %c0_59 = arith.constant 0 : index
    %81 = vector.load %arg4[%c0_58, %c0_59] : memref<128x128xbf16, #tpu.memory_space<vmem>>, vector<128x128xbf16>
    %c0_60 = arith.constant 0 : index
    %c0_61 = arith.constant 0 : index
    %82 = vector.load %arg4[%c0_60, %c0_61] : memref<128x128xbf16, #tpu.memory_space<vmem>>, vector<128x128xbf16>
    %cst_62 = arith.constant dense<0.000000e+00> : vector<128x128xf32>
    %83 = tpu.matmul %81, %82, %cst_62 {dimension_numbers = #tpu.dot_dimension_numbers<[1], [0], [0], [1], [0, 0, 1, 1], [], []>} : vector<128x128xbf16>, vector<128x128xbf16>, vector<128x128xf32> -> vector<128x128xf32>
    %cst_63 = arith.constant 0.000000e+00 : f32
    %84 = vector.broadcast %cst_63 : f32 to vector<128x128xf32>
    %85 = arith.cmpf ogt, %83, %84 : vector<128x128xf32>
    %cst_64 = arith.constant 1.000000e+00 : f32
    %cst_65 = arith.constant 0.000000e+00 : f32
    %86 = vector.broadcast %cst_64 : f32 to vector<128x128xf32>
    %87 = vector.broadcast %cst_65 : f32 to vector<128x128xf32>
    %88 = arith.select %85, %86, %87 : vector<128x128xi1>, vector<128x128xf32>
    %89 = arith.truncf %88 : vector<128x128xf32> to vector<128x128xbf16>
    %c0_66 = arith.constant 0 : index
    %c0_67 = arith.constant 0 : index
    %90 = vector.load %arg4[%c0_66, %c0_67] : memref<128x128xbf16, #tpu.memory_space<vmem>>, vector<128x128xbf16>
    tpu.vector_store %arg4[%c0_66, %c0_67], %89 {strides = array<i32>} : memref<128x128xbf16, #tpu.memory_space<vmem>>, vector<128x128xbf16>,
    %c0_68 = arith.constant 0 : index
    %c0_69 = arith.constant 0 : index
    %91 = vector.load %arg4[%c0_68, %c0_69] : memref<128x128xbf16, #tpu.memory_space<vmem>>, vector<128x128xbf16>
    %c0_70 = arith.constant 0 : index
    %c0_71 = arith.constant 0 : index
    %92 = vector.load %arg4[%c0_70, %c0_71] : memref<128x128xbf16, #tpu.memory_space<vmem>>, vector<128x128xbf16>
    %cst_72 = arith.constant dense<0.000000e+00> : vector<128x128xf32>
    %93 = tpu.matmul %91, %92, %cst_72 {dimension_numbers = #tpu.dot_dimension_numbers<[1], [0], [0], [1], [0, 0, 1, 1], [], []>} : vector<128x128xbf16>, vector<128x128xbf16>, vector<128x128xf32> -> vector<128x128xf32>
    %cst_73 = arith.constant 0.000000e+00 : f32
    %94 = vector.broadcast %cst_73 : f32 to vector<128x128xf32>
    %95 = arith.cmpf ogt, %93, %94 : vector<128x128xf32>
    %cst_74 = arith.constant 1.000000e+00 : f32
    %cst_75 = arith.constant 0.000000e+00 : f32
    %96 = vector.broadcast %cst_74 : f32 to vector<128x128xf32>
    %97 = vector.broadcast %cst_75 : f32 to vector<128x128xf32>
    %98 = arith.select %95, %96, %97 : vector<128x128xi1>, vector<128x128xf32>
    %99 = arith.truncf %98 : vector<128x128xf32> to vector<128x128xbf16>
    %c0_76 = arith.constant 0 : index
    %c0_77 = arith.constant 0 : index
    %100 = vector.load %arg4[%c0_76, %c0_77] : memref<128x128xbf16, #tpu.memory_space<vmem>>, vector<128x128xbf16>
    tpu.vector_store %arg4[%c0_76, %c0_77], %99 {strides = array<i32>} : memref<128x128xbf16, #tpu.memory_space<vmem>>, vector<128x128xbf16>,
    %cst_78 = arith.constant 1.280000e+02 : f32
    %101 = vector.broadcast %cst_78 : f32 to vector<1x128xf32>
    %c0_79 = arith.constant 0 : index
    %c0_80 = arith.constant 0 : index
    %102 = vector.load %arg4[%c0_79, %c0_80] : memref<128x128xbf16, #tpu.memory_space<vmem>>, vector<128x128xbf16>
    %103 = arith.extf %102 : vector<128x128xbf16> to vector<128x128xf32>
    %104 = tpu.iota {dimensions = array<i32: 0>} : vector<128x128xi32>
    %c0_i32 = arith.constant 0 : i32
    %105 = vector.broadcast %c0_i32 : i32 to vector<128x128xi32>
    %106 = arith.addi %104, %105 : vector<128x128xi32>
    %107 = arith.sitofp %106 : vector<128x128xi32> to vector<128x128xf32>
    %cst_81 = arith.constant 0.000000e+00 : f32
    %108 = vector.broadcast %cst_81 : f32 to vector<128x128xf32>
    %109 = arith.cmpf ogt, %103, %108 : vector<128x128xf32>
    %cst_82 = arith.constant 1.280000e+02 : f32
    %110 = vector.broadcast %cst_82 : f32 to vector<128x128xf32>
    %111 = arith.select %109, %107, %110 : vector<128x128xi1>, vector<128x128xf32>
    %cst_83 = arith.constant dense<0x7F800000> : vector<128xf32>
    %112 = vector.multi_reduction <minimumf>, %111, %cst_83 [0] : vector<128x128xf32> to vector<128xf32>
    %113 = vector.shape_cast %112 : vector<128xf32> to vector<1x128xf32>
    %114 = arith.minimumf %101, %113 : vector<1x128xf32>
    %115 = arith.fptosi %114 : vector<1x128xf32> to vector<1x128xi32>
    %c0_84 = arith.constant 0 : index
    %c0_85 = arith.constant 0 : index
    %116 = vector.load %arg3[%c0_84, %c0_85] : memref<1x128xi32, #tpu.memory_space<vmem>>, vector<1x128xi32>
    tpu.vector_store %arg3[%c0_84, %c0_85], %115 {strides = array<i32>} : memref<1x128xi32, #tpu.memory_space<vmem>>, vector<1x128xi32>,
    return
  }
  func.func @transform_0(%arg0: i32) -> (i32, i32) {
    %c0_i32 = arith.constant 0 : i32
    %c0_i32_0 = arith.constant 0 : i32
    %c0_i32_1 = arith.constant 0 : i32
    return %c0_i32, %c0_i32_0 : i32, i32
  }
  func.func @transform_1(%arg0: i32) -> (i32, i32) {
    %c0_i32 = arith.constant 0 : i32
    %c0_i32_0 = arith.constant 0 : i32
    %c0_i32_1 = arith.constant 0 : i32
    return %c0_i32, %c0_i32_0 : i32, i32
  }
  func.func @transform_2(%arg0: i32) -> (i32, i32) {
    %c0_i32 = arith.constant 0 : i32
    %c0_i32_0 = arith.constant 0 : i32
    %c0_i32_1 = arith.constant 0 : i32
    return %c0_i32, %c0_i32_0 : i32, i32
  }
}

</mosaic_0001>

<llo_original>
// kernel: tpu_custom_call.1
$region0: #{tpu_custom_call.1}
  #allocation0 [shape = 'u32[]', space=smem, size = 0x4, offset = 0x4, fixed_abs, tag = 'smem constant byte address 0x4 - core index']
  #allocation1 [shape = 'u32[144,128]{1,0:T(1,128)}', space=vmem, size = 0x12000, scoped, tag = 'internal scratch']
  #allocation2 [shape = 'bf16[128,128]{1,0:T(16,128)(2,1)}', space=vmem, size = 0x8000, scoped, tag = 'scratch operand']
  %s0 = inlined_call_operand.vmem [shape: f32[128,8], index: 0, kind: input, shape index: {}]
  %s1 = inlined_call_operand.vmem [shape: f32[8,128], index: 1, kind: input, shape index: {}]
  %s2 = inlined_call_operand.hbm [shape: s32[1,128], index: 2, kind: output, shape index: {}]
  %s3 = sld [smem:[#allocation0]]
  $region18: #{tpu_custom_call.1} parent=0
    _
  %s5 = ssub.s32 1, %s3
  %s6 = scalar_select 0, %s5, %s3
  $region1: #{tpu_custom_call.1} parent=0
    #allocation3 [shape = 'u8[512]{0}', space=vmem, size = 0x400, scoped, tag = 'output window, operand 0, single buffered']
    #allocation4 [shape = 's32[1]{0}', space=sflag, size = 0x4, scoped, tag = 'scoped memory for tpu_custom_call.1']
    %7 = vsyncpa [#allocation4], 0
    // Predicated region
    $region2: #{tpu_custom_call.1} parent=1 // pred_check
      _
    $region3: #{tpu_custom_call.1} parent=1 // pred_check_branch
      %9 = sbr.rel (0) target = $region5
    $region4: #{tpu_custom_call.1} parent=1 // pred_region
      _
    $region5: #{tpu_custom_call.1} parent=1 // pred_fallthru
      _
    // Predicated region
    $region6: #{tpu_custom_call.1} parent=1 // pred_check
      _
    $region7: #{tpu_custom_call.1} parent=1 // pred_check_branch
      %11 = sbr.rel (0) target = $region9
    $region8: #{tpu_custom_call.1} parent=1 // pred_region
      _
    $region9: #{tpu_custom_call.1} parent=1 // pred_fallthru
      _
    %v13 = vld [vmem:[%s1] sm:$0xff]
    %v14 = vld [vmem:[%s0] sm:$0xff]
    %v15 = vld [vmem:[%s0 + $0x8] sm:$0xff]
    %v16 = vld [vmem:[%s0 + $0x10] sm:$0xff]
    %v17 = vld [vmem:[%s0 + $0x18] sm:$0xff]
    %v18 = vld [vmem:[%s0 + $0x20] sm:$0xff]
    %v19 = vld [vmem:[%s0 + $0x28] sm:$0xff]
    %v20 = vld [vmem:[%s0 + $0x30] sm:$0xff]
    %v21 = vld [vmem:[%s0 + $0x38] sm:$0xff]
    %v22 = vld [vmem:[%s0 + $0x40] sm:$0xff]
    %v23 = vld [vmem:[%s0 + $0x48] sm:$0xff]
    %v24 = vld [vmem:[%s0 + $0x50] sm:$0xff]
    %v25 = vld [vmem:[%s0 + $0x58] sm:$0xff]
    %v26 = vld [vmem:[%s0 + $0x60] sm:$0xff]
    %v27 = vld [vmem:[%s0 + $0x68] sm:$0xff]
    %v28 = vld [vmem:[%s0 + $0x70] sm:$0xff]
    %v29 = vld [vmem:[%s0 + $0x78] sm:$0xff]
    %31 = vset.pattern.permute.xlu0 0
    %32 = vperm.xlu0 %31, %v14
    %v33 = vpop.permute.xlu0 %32
    %36 = vset.pattern.permute.xlu0 0
    %37 = vperm.xlu0 %36, %v15
    %v38 = vpop.permute.xlu0 %37
    %41 = vset.pattern.permute.xlu0 0
    %42 = vperm.xlu0 %41, %v16
    %v43 = vpop.permute.xlu0 %42
    %46 = vset.pattern.permute.xlu0 0
    %47 = vperm.xlu0 %46, %v17
    %v48 = vpop.permute.xlu0 %47
    %51 = vset.pattern.permute.xlu0 0
    %52 = vperm.xlu0 %51, %v18
    %v53 = vpop.permute.xlu0 %52
    %56 = vset.pattern.permute.xlu0 0
    %57 = vperm.xlu0 %56, %v19
    %v58 = vpop.permute.xlu0 %57
    %61 = vset.pattern.permute.xlu0 0
    %62 = vperm.xlu0 %61, %v20
    %v63 = vpop.permute.xlu0 %62
    %66 = vset.pattern.permute.xlu0 0
    %67 = vperm.xlu0 %66, %v21
    %v68 = vpop.permute.xlu0 %67
    %71 = vset.pattern.permute.xlu0 0
    %72 = vperm.xlu0 %71, %v22
    %v73 = vpop.permute.xlu0 %72
    %76 = vset.pattern.permute.xlu0 0
    %77 = vperm.xlu0 %76, %v23
    %v78 = vpop.permute.xlu0 %77
    %81 = vset.pattern.permute.xlu0 0
    %82 = vperm.xlu0 %81, %v24
    %v83 = vpop.permute.xlu0 %82
    %86 = vset.pattern.permute.xlu0 0
    %87 = vperm.xlu0 %86, %v25
    %v88 = vpop.permute.xlu0 %87
    %91 = vset.pattern.permute.xlu0 0
    %92 = vperm.xlu0 %91, %v26
    %v93 = vpop.permute.xlu0 %92
    %96 = vset.pattern.permute.xlu0 0
    %97 = vperm.xlu0 %96, %v27
    %v98 = vpop.permute.xlu0 %97
    %101 = vset.pattern.permute.xlu0 0
    %102 = vperm.xlu0 %101, %v28
    %v103 = vpop.permute.xlu0 %102
    %106 = vset.pattern.permute.xlu0 0
    %107 = vperm.xlu0 %106, %v29
    %v108 = vpop.permute.xlu0 %107
    %v110 = vlaneseq
    %v111 = vshrl.u32 %v110, 7
    %v112 = vsub.s32 0, %v111
    %v113 = vrot.slane %v13, %v112
    %v114 = vsub.f32 %v33, %v113
    %v115 = vsub.f32 %v38, %v113
    %v116 = vsub.f32 %v43, %v113
    %v117 = vsub.f32 %v48, %v113
    %v118 = vsub.f32 %v53, %v113
    %v119 = vsub.f32 %v58, %v113
    %v120 = vsub.f32 %v63, %v113
    %v121 = vsub.f32 %v68, %v113
    %v122 = vsub.f32 %v73, %v113
    %v123 = vsub.f32 %v78, %v113
    %v124 = vsub.f32 %v83, %v113
    %v125 = vsub.f32 %v88, %v113
    %v126 = vsub.f32 %v93, %v113
    %v127 = vsub.f32 %v98, %v113
    %v128 = vsub.f32 %v103, %v113
    %v129 = vsub.f32 %v108, %v113
    %v130 = vmul.f32 %v114, %v114
    %v131 = vmul.f32 %v115, %v115
    %v132 = vmul.f32 %v116, %v116
    %v133 = vmul.f32 %v117, %v117
    %v134 = vmul.f32 %v118, %v118
    %v135 = vmul.f32 %v119, %v119
    %v136 = vmul.f32 %v120, %v120
    %v137 = vmul.f32 %v121, %v121
    %v138 = vmul.f32 %v122, %v122
    %v139 = vmul.f32 %v123, %v123
    %v140 = vmul.f32 %v124, %v124
    %v141 = vmul.f32 %v125, %v125
    %v142 = vmul.f32 %v126, %v126
    %v143 = vmul.f32 %v127, %v127
    %v144 = vmul.f32 %v128, %v128
    %v145 = vmul.f32 %v129, %v129
    %v146 = vadd.f32 %v130, 0.0
    %v147 = vadd.f32 %v131, 0.0
    %v148 = vadd.f32 %v132, 0.0
    %v149 = vadd.f32 %v133, 0.0
    %v150 = vadd.f32 %v134, 0.0
    %v151 = vadd.f32 %v135, 0.0
    %v152 = vadd.f32 %v136, 0.0
    %v153 = vadd.f32 %v137, 0.0
    %v154 = vadd.f32 %v138, 0.0
    %v155 = vadd.f32 %v139, 0.0
    %v156 = vadd.f32 %v140, 0.0
    %v157 = vadd.f32 %v141, 0.0
    %v158 = vadd.f32 %v142, 0.0
    %v159 = vadd.f32 %v143, 0.0
    %v160 = vadd.f32 %v144, 0.0
    %v161 = vadd.f32 %v145, 0.0
    %162 = vset.pattern.permute.xlu0 1
    %163 = vperm.xlu0 %162, %v14
    %v164 = vpop.permute.xlu0 %163
    %166 = vset.pattern.permute.xlu0 1
    %167 = vperm.xlu0 %166, %v15
    %v168 = vpop.permute.xlu0 %167
    %170 = vset.pattern.permute.xlu0 1
    %171 = vperm.xlu0 %170, %v16
    %v172 = vpop.permute.xlu0 %171
    %174 = vset.pattern.permute.xlu0 1
    %175 = vperm.xlu0 %174, %v17
    %v176 = vpop.permute.xlu0 %175
    %178 = vset.pattern.permute.xlu0 1
    %179 = vperm.xlu0 %178, %v18
    %v180 = vpop.permute.xlu0 %179
    %182 = vset.pattern.permute.xlu0 1
    %183 = vperm.xlu0 %182, %v19
    %v184 = vpop.permute.xlu0 %183
    %186 = vset.pattern.permute.xlu0 1
    %187 = vperm.xlu0 %186, %v20
    %v188 = vpop.permute.xlu0 %187
    %190 = vset.pattern.permute.xlu0 1
    %191 = vperm.xlu0 %190, %v21
    %v192 = vpop.permute.xlu0 %191
    %194 = vset.pattern.permute.xlu0 1
    %195 = vperm.xlu0 %194, %v22
    %v196 = vpop.permute.xlu0 %195
    %198 = vset.pattern.permute.xlu0 1
    %199 = vperm.xlu0 %198, %v23
    %v200 = vpop.permute.xlu0 %199
    %202 = vset.pattern.permute.xlu0 1
    %203 = vperm.xlu0 %202, %v24
    %v204 = vpop.permute.xlu0 %203
    %206 = vset.pattern.permute.xlu0 1
    %207 = vperm.xlu0 %206, %v25
    %v208 = vpop.permute.xlu0 %207
    %210 = vset.pattern.permute.xlu0 1
    %211 = vperm.xlu0 %210, %v26
    %v212 = vpop.permute.xlu0 %211
    %214 = vset.pattern.permute.xlu0 1
    %215 = vperm.xlu0 %214, %v27
    %v216 = vpop.permute.xlu0 %215
    %218 = vset.pattern.permute.xlu0 1
    %219 = vperm.xlu0 %218, %v28
    %v220 = vpop.permute.xlu0 %219
    %222 = vset.pattern.permute.xlu0 1
    %223 = vperm.xlu0 %222, %v29
    %v224 = vpop.permute.xlu0 %223
    %v226 = vlaneseq
    %v227 = vshrl.u32 %v226, 7
    %v228 = vsub.s32 1, %v227
    %v229 = vrot.slane %v13, %v228
    %v230 = vsub.f32 %v164, %v229
    %v231 = vsub.f32 %v168, %v229
    %v232 = vsub.f32 %v172, %v229
    %v233 = vsub.f32 %v176, %v229
    %v234 = vsub.f32 %v180, %v229
    %v235 = vsub.f32 %v184, %v229
    %v236 = vsub.f32 %v188, %v229
    %v237 = vsub.f32 %v192, %v229
    %v238 = vsub.f32 %v196, %v229
    %v239 = vsub.f32 %v200, %v229
    %v240 = vsub.f32 %v204, %v229
    %v241 = vsub.f32 %v208, %v229
    %v242 = vsub.f32 %v212, %v229
    %v243 = vsub.f32 %v216, %v229
    %v244 = vsub.f32 %v220, %v229
    %v245 = vsub.f32 %v224, %v229
    %v246 = vmul.f32 %v230, %v230
    %v247 = vmul.f32 %v231, %v231
    %v248 = vmul.f32 %v232, %v232
    %v249 = vmul.f32 %v233, %v233
    %v250 = vmul.f32 %v234, %v234
    %v251 = vmul.f32 %v235, %v235
    %v252 = vmul.f32 %v236, %v236
    %v253 = vmul.f32 %v237, %v237
    %v254 = vmul.f32 %v238, %v238
    %v255 = vmul.f32 %v239, %v239
    %v256 = vmul.f32 %v240, %v240
    %v257 = vmul.f32 %v241, %v241
    %v258 = vmul.f32 %v242, %v242
    %v259 = vmul.f32 %v243, %v243
    %v260 = vmul.f32 %v244, %v244
    %v261 = vmul.f32 %v245, %v245
    %v262 = vadd.f32 %v146, %v246
    %v263 = vadd.f32 %v147, %v247
    %v264 = vadd.f32 %v148, %v248
    %v265 = vadd.f32 %v149, %v249
    %v266 = vadd.f32 %v150, %v250
    %v267 = vadd.f32 %v151, %v251
    %v268 = vadd.f32 %v152, %v252
    %v269 = vadd.f32 %v153, %v253
    %v270 = vadd.f32 %v154, %v254
    %v271 = vadd.f32 %v155, %v255
    %v272 = vadd.f32 %v156, %v256
    %v273 = vadd.f32 %v157, %v257
    %v274 = vadd.f32 %v158, %v258
    %v275 = vadd.f32 %v159, %v259
    %v276 = vadd.f32 %v160, %v260
    %v277 = vadd.f32 %v161, %v261
    %278 = vset.pattern.permute.xlu0 2
    %279 = vperm.xlu0 %278, %v14
    %v280 = vpop.permute.xlu0 %279
    %282 = vset.pattern.permute.xlu0 2
    %283 = vperm.xlu0 %282, %v15
    %v284 = vpop.permute.xlu0 %283
    %286 = vset.pattern.permute.xlu0 2
    %287 = vperm.xlu0 %286, %v16
    %v288 = vpop.permute.xlu0 %287
    %290 = vset.pattern.permute.xlu0 2
    %291 = vperm.xlu0 %290, %v17
    %v292 = vpop.permute.xlu0 %291
    %294 = vset.pattern.permute.xlu0 2
    %295 = vperm.xlu0 %294, %v18
    %v296 = vpop.permute.xlu0 %295
    %298 = vset.pattern.permute.xlu0 2
    %299 = vperm.xlu0 %298, %v19
    %v300 = vpop.permute.xlu0 %299
    %302 = vset.pattern.permute.xlu0 2
    %303 = vperm.xlu0 %302, %v20
    %v304 = vpop.permute.xlu0 %303
    %306 = vset.pattern.permute.xlu0 2
    %307 = vperm.xlu0 %306, %v21
    %v308 = vpop.permute.xlu0 %307
    %310 = vset.pattern.permute.xlu0 2
    %311 = vperm.xlu0 %310, %v22
    %v312 = vpop.permute.xlu0 %311
    %314 = vset.pattern.permute.xlu0 2
    %315 = vperm.xlu0 %314, %v23
    %v316 = vpop.permute.xlu0 %315
    %318 = vset.pattern.permute.xlu0 2
    %319 = vperm.xlu0 %318, %v24
    %v320 = vpop.permute.xlu0 %319
    %322 = vset.pattern.permute.xlu0 2
    %323 = vperm.xlu0 %322, %v25
    %v324 = vpop.permute.xlu0 %323
    %326 = vset.pattern.permute.xlu0 2
    %327 = vperm.xlu0 %326, %v26
    %v328 = vpop.permute.xlu0 %327
    %330 = vset.pattern.permute.xlu0 2
    %331 = vperm.xlu0 %330, %v27
    %v332 = vpop.permute.xlu0 %331
    %334 = vset.pattern.permute.xlu0 2
    %335 = vperm.xlu0 %334, %v28
    %v336 = vpop.permute.xlu0 %335
    %338 = vset.pattern.permute.xlu0 2
    %339 = vperm.xlu0 %338, %v29
    %v340 = vpop.permute.xlu0 %339
    %v342 = vlaneseq
    %v343 = vshrl.u32 %v342, 7
    %v344 = vsub.s32 2, %v343
    %v345 = vrot.slane %v13, %v344
    %v346 = vsub.f32 %v280, %v345
    %v347 = vsub.f32 %v284, %v345
    %v348 = vsub.f32 %v288, %v345
    %v349 = vsub.f32 %v292, %v345
    %v350 = vsub.f32 %v296, %v345
    %v351 = vsub.f32 %v300, %v345
    %v352 = vsub.f32 %v304, %v345
    %v353 = vsub.f32 %v308, %v345
    %v354 = vsub.f32 %v312, %v345
    %v355 = vsub.f32 %v316, %v345
    %v356 = vsub.f32 %v320, %v345
    %v357 = vsub.f32 %v324, %v345
    %v358 = vsub.f32 %v328, %v345
    %v359 = vsub.f32 %v332, %v345
    %v360 = vsub.f32 %v336, %v345
    %v361 = vsub.f32 %v340, %v345
    %v362 = vmul.f32 %v346, %v346
    %v363 = vmul.f32 %v347, %v347
    %v364 = vmul.f32 %v348, %v348
    %v365 = vmul.f32 %v349, %v349
    %v366 = vmul.f32 %v350, %v350
    %v367 = vmul.f32 %v351, %v351
    %v368 = vmul.f32 %v352, %v352
    %v369 = vmul.f32 %v353, %v353
    %v370 = vmul.f32 %v354, %v354
    %v371 = vmul.f32 %v355, %v355
    %v372 = vmul.f32 %v356, %v356
    %v373 = vmul.f32 %v357, %v357
    %v374 = vmul.f32 %v358, %v358
    %v375 = vmul.f32 %v359, %v359
    %v376 = vmul.f32 %v360, %v360
    %v377 = vmul.f32 %v361, %v361
    %v378 = vadd.f32 %v262, %v362
    %v379 = vadd.f32 %v263, %v363
    %v380 = vadd.f32 %v264, %v364
    %v381 = vadd.f32 %v265, %v365
    %v382 = vadd.f32 %v266, %v366
    %v383 = vadd.f32 %v267, %v367
    %v384 = vadd.f32 %v268, %v368
    %v385 = vadd.f32 %v269, %v369
    %v386 = vadd.f32 %v270, %v370
    %v387 = vadd.f32 %v271, %v371
    %v388 = vadd.f32 %v272, %v372
    %v389 = vadd.f32 %v273, %v373
    %v390 = vadd.f32 %v274, %v374
    %v391 = vadd.f32 %v275, %v375
    %v392 = vadd.f32 %v276, %v376
    %v393 = vadd.f32 %v277, %v377
    %vm394 = vcmp.le.f32.partialorder %v378, 4.0
    %vm395 = vcmp.le.f32.partialorder %v379, 4.0
    %vm396 = vcmp.le.f32.partialorder %v380, 4.0
    %vm397 = vcmp.le.f32.partialorder %v381, 4.0
    %vm398 = vcmp.le.f32.partialorder %v382, 4.0
    %vm399 = vcmp.le.f32.partialorder %v383, 4.0
    %vm400 = vcmp.le.f32.partialorder %v384, 4.0
    %vm401 = vcmp.le.f32.partialorder %v385, 4.0
    %vm402 = vcmp.le.f32.partialorder %v386, 4.0
    %vm403 = vcmp.le.f32.partialorder %v387, 4.0
    %vm404 = vcmp.le.f32.partialorder %v388, 4.0
    %vm405 = vcmp.le.f32.partialorder %v389, 4.0
    %vm406 = vcmp.le.f32.partialorder %v390, 4.0
    %vm407 = vcmp.le.f32.partialorder %v391, 4.0
    %vm408 = vcmp.le.f32.partialorder %v392, 4.0
    %vm409 = vcmp.le.f32.partialorder %v393, 4.0
    %v410 = vsel %vm394, 1.0, 0.0
    %v411 = vsel %vm395, 1.0, 0.0
    %v412 = vsel %vm396, 1.0, 0.0
    %v413 = vsel %vm397, 1.0, 0.0
    %v414 = vsel %vm398, 1.0, 0.0
    %v415 = vsel %vm399, 1.0, 0.0
    %v416 = vsel %vm400, 1.0, 0.0
    %v417 = vsel %vm401, 1.0, 0.0
    %v418 = vsel %vm402, 1.0, 0.0
    %v419 = vsel %vm403, 1.0, 0.0
    %v420 = vsel %vm404, 1.0, 0.0
    %v421 = vsel %vm405, 1.0, 0.0
    %v422 = vsel %vm406, 1.0, 0.0
    %v423 = vsel %vm407, 1.0, 0.0
    %v424 = vsel %vm408, 1.0, 0.0
    %v425 = vsel %vm409, 1.0, 0.0
    %v426 = vpack.c.bf16 %v411, %v410
    %v427 = vpack.c.bf16 %v413, %v412
    %v428 = vpack.c.bf16 %v415, %v414
    %v429 = vpack.c.bf16 %v417, %v416
    %v430 = vpack.c.bf16 %v419, %v418
    %v431 = vpack.c.bf16 %v421, %v420
    %v432 = vpack.c.bf16 %v423, %v422
    %v433 = vpack.c.bf16 %v425, %v424
    %434 = vst [vmem:[#allocation2] sm:$0xff] %v426
    %435 = vst [vmem:[#allocation2 + $0x8] sm:$0xff] %v427
    %436 = vst [vmem:[#allocation2 + $0x10] sm:$0xff] %v428
    %437 = vst [vmem:[#allocation2 + $0x18] sm:$0xff] %v429
    %438 = vst [vmem:[#allocation2 + $0x20] sm:$0xff] %v430
    %439 = vst [vmem:[#allocation2 + $0x28] sm:$0xff] %v431
    %440 = vst [vmem:[#allocation2 + $0x30] sm:$0xff] %v432
    %441 = vst [vmem:[#allocation2 + $0x38] sm:$0xff] %v433
    %v442 = vld [vmem:[#allocation2] sm:$0xff]
    %v443 = vld [vmem:[#allocation2 + $0x8] sm:$0xff]
    %v444 = vld [vmem:[#allocation2 + $0x10] sm:$0xff]
    %v445 = vld [vmem:[#allocation2 + $0x18] sm:$0xff]
    %v446 = vld [vmem:[#allocation2 + $0x20] sm:$0xff]
    %v447 = vld [vmem:[#allocation2 + $0x28] sm:$0xff]
    %v448 = vld [vmem:[#allocation2 + $0x30] sm:$0xff]
    %v449 = vld [vmem:[#allocation2 + $0x38] sm:$0xff]
    %450 = vmatprep.subr.bf16.mxu0 0
    %451 = vmatpush1.bf16.msra.mxu0 %v442
    %452 = vmatprep.subr.bf16.mxu0 0
    %453 = vmatpush1.bf16.msra.mxu0 %v443
    %454 = vmatprep.subr.bf16.mxu0 0
    %455 = vmatpush1.bf16.msra.mxu0 %v444
    %456 = vmatprep.subr.bf16.mxu0 0
    %457 = vmatpush1.bf16.msra.mxu0 %v445
    %458 = vmatprep.subr.bf16.mxu0 0
    %459 = vmatpush1.bf16.msra.mxu0 %v446
    %460 = vmatprep.subr.bf16.mxu0 0
    %461 = vmatpush1.bf16.msra.mxu0 %v447
    %462 = vmatprep.subr.bf16.mxu0 0
    %463 = vmatpush1.bf16.msra.mxu0 %v448
    %464 = vmatprep.subr.bf16.mxu0 0
    %465 = vmatpush1.bf16.msra.mxu0 %v449
    %466 = vmatprep.subr.bf16.mxu0 0
    %467 = vmatpush1.bf16.msra.mxu0 0
    %468 = vmatprep.subr.bf16.mxu0 0
    %469 = vmatpush1.bf16.msra.mxu0 0
    %470 = vmatprep.subr.bf16.mxu0 0
    %471 = vmatpush1.bf16.msra.mxu0 0
    %472 = vmatprep.subr.bf16.mxu0 0
    %473 = vmatpush1.bf16.msra.mxu0 0
    %474 = vmatprep.subr.bf16.mxu0 0
    %475 = vmatpush1.bf16.msra.mxu0 0
    %476 = vmatprep.subr.bf16.mxu0 0
    %477 = vmatpush1.bf16.msra.mxu0 0
    %478 = vmatprep.subr.bf16.mxu0 0
    %479 = vmatpush1.bf16.msra.mxu0 0
    %480 = vmatprep.subr.bf16.mxu0 0
    %481 = vmatpush1.bf16.msra.mxu0 0
    %482 = vmatprep.mubr.bf16.mxu0 0
    %483 = vmatmul.mubr.bf16.gmra.mrb[0].mxu0 %v442
    %v484 = vpop.f32.mrb[0].mxu0
    %v485 = vadd.f32 0.0, %v484
    %v486 = vpop.f32.mrb[0].mxu0
    %v487 = vpop.f32.mrb[0].mxu0
    %v488 = vadd.f32 0.0, %v487
    %v489 = vpop.f32.mrb[0].mxu0
    %490 = vmatprep.mubr.bf16.mxu0 0
    %491 = vmatmul.mubr.bf16.gmra.mrb[0].mxu0 %v443
    %v492 = vpop.f32.mrb[0].mxu0
    %v493 = vadd.f32 0.0, %v492
    %v494 = vpop.f32.mrb[0].mxu0
    %v495 = vpop.f32.mrb[0].mxu0
    %v496 = vadd.f32 0.0, %v495
    %v497 = vpop.f32.mrb[0].mxu0
    %498 = vmatprep.mubr.bf16.mxu0 0
    %499 = vmatmul.mubr.bf16.gmra.mrb[0].mxu0 %v444
    %v500 = vpop.f32.mrb[0].mxu0
    %v501 = vadd.f32 0.0, %v500
    %v502 = vpop.f32.mrb[0].mxu0
    %v503 = vpop.f32.mrb[0].mxu0
    %v504 = vadd.f32 0.0, %v503
    %v505 = vpop.f32.mrb[0].mxu0
    %506 = vmatprep.mubr.bf16.mxu0 0
    %507 = vmatmul.mubr.bf16.gmra.mrb[0].mxu0 %v445
    %v508 = vpop.f32.mrb[0].mxu0
    %v509 = vadd.f32 0.0, %v508
    %v510 = vpop.f32.mrb[0].mxu0
    %v511 = vpop.f32.mrb[0].mxu0
    %v512 = vadd.f32 0.0, %v511
    %v513 = vpop.f32.mrb[0].mxu0
    %514 = vmatprep.mubr.bf16.mxu0 0
    %515 = vmatmul.mubr.bf16.gmra.mrb[0].mxu0 %v446
    %v516 = vpop.f32.mrb[0].mxu0
    %v517 = vadd.f32 0.0, %v516
    %v518 = vpop.f32.mrb[0].mxu0
    %v519 = vpop.f32.mrb[0].mxu0
    %v520 = vadd.f32 0.0, %v519
    %v521 = vpop.f32.mrb[0].mxu0
    %522 = vmatprep.mubr.bf16.mxu0 0
    %523 = vmatmul.mubr.bf16.gmra.mrb[0].mxu0 %v447
    %v524 = vpop.f32.mrb[0].mxu0
    %v525 = vadd.f32 0.0, %v524
    %v526 = vpop.f32.mrb[0].mxu0
    %v527 = vpop.f32.mrb[0].mxu0
    %v528 = vadd.f32 0.0, %v527
    %v529 = vpop.f32.mrb[0].mxu0
    %530 = vmatprep.mubr.bf16.mxu0 0
    %531 = vmatmul.mubr.bf16.gmra.mrb[0].mxu0 %v448
    %v532 = vpop.f32.mrb[0].mxu0
    %v533 = vadd.f32 0.0, %v532
    %v534 = vpop.f32.mrb[0].mxu0
    %v535 = vpop.f32.mrb[0].mxu0
    %v536 = vadd.f32 0.0, %v535
    %v537 = vpop.f32.mrb[0].mxu0
    %538 = vmatprep.mubr.bf16.mxu0 0
    %539 = vmatmul.mubr.bf16.gmra.mrb[0].mxu0 %v449
    %v540 = vpop.f32.mrb[0].mxu0
    %v541 = vadd.f32 0.0, %v540
    %v542 = vpop.f32.mrb[0].mxu0
    %v543 = vpop.f32.mrb[0].mxu0
    %v544 = vadd.f32 0.0, %v543
    %v545 = vpop.f32.mrb[0].mxu0
    %546 = vdwg.mxu0
    %vm547 = vcmp.gt.f32.partialorder %v485, 0.0
    %vm548 = vcmp.gt.f32.partialorder %v488, 0.0
    %vm549 = vcmp.gt.f32.partialorder %v493, 0.0
    %vm550 = vcmp.gt.f32.partialorder %v496, 0.0
    %vm551 = vcmp.gt.f32.partialorder %v501, 0.0
    %vm552 = vcmp.gt.f32.partialorder %v504, 0.0
    %vm553 = vcmp.gt.f32.partialorder %v509, 0.0
    %vm554 = vcmp.gt.f32.partialorder %v512, 0.0
    %vm555 = vcmp.gt.f32.partialorder %v517, 0.0
    %vm556 = vcmp.gt.f32.partialorder %v520, 0.0
    %vm557 = vcmp.gt.f32.partialorder %v525, 0.0
    %vm558 = vcmp.gt.f32.partialorder %v528, 0.0
    %vm559 = vcmp.gt.f32.partialorder %v533, 0.0
    %vm560 = vcmp.gt.f32.partialorder %v536, 0.0
    %vm561 = vcmp.gt.f32.partialorder %v541, 0.0
    %vm562 = vcmp.gt.f32.partialorder %v544, 0.0
    %v563 = vsel %vm547, 1.0, 0.0
    %v564 = vsel %vm548, 1.0, 0.0
    %v565 = vsel %vm549, 1.0, 0.0
    %v566 = vsel %vm550, 1.0, 0.0
    %v567 = vsel %vm551, 1.0, 0.0
    %v568 = vsel %vm552, 1.0, 0.0
    %v569 = vsel %vm553, 1.0, 0.0
    %v570 = vsel %vm554, 1.0, 0.0
    %v571 = vsel %vm555, 1.0, 0.0
    %v572 = vsel %vm556, 1.0, 0.0
    %v573 = vsel %vm557, 1.0, 0.0
    %v574 = vsel %vm558, 1.0, 0.0
    %v575 = vsel %vm559, 1.0, 0.0
    %v576 = vsel %vm560, 1.0, 0.0
    %v577 = vsel %vm561, 1.0, 0.0
    %v578 = vsel %vm562, 1.0, 0.0
    %v579 = vpack.c.bf16 %v564, %v563
    %v580 = vpack.c.bf16 %v566, %v565
    %v581 = vpack.c.bf16 %v568, %v567
    %v582 = vpack.c.bf16 %v570, %v569
    %v583 = vpack.c.bf16 %v572, %v571
    %v584 = vpack.c.bf16 %v574, %v573
    %v585 = vpack.c.bf16 %v576, %v575
    %v586 = vpack.c.bf16 %v578, %v577
    %587 = vst [vmem:[#allocation2] sm:$0xff] %v579
    %588 = vst [vmem:[#allocation2 + $0x8] sm:$0xff] %v580
    %589 = vst [vmem:[#allocation2 + $0x10] sm:$0xff] %v581
    %590 = vst [vmem:[#allocation2 + $0x18] sm:$0xff] %v582
    %591 = vst [vmem:[#allocation2 + $0x20] sm:$0xff] %v583
    %592 = vst [vmem:[#allocation2 + $0x28] sm:$0xff] %v584
    %593 = vst [vmem:[#allocation2 + $0x30] sm:$0xff] %v585
    %594 = vst [vmem:[#allocation2 + $0x38] sm:$0xff] %v586
    %v595 = vld [vmem:[#allocation2] sm:$0xff]
    %v596 = vld [vmem:[#allocation2 + $0x8] sm:$0xff]
    %v597 = vld [vmem:[#allocation2 + $0x10] sm:$0xff]
    %v598 = vld [vmem:[#allocation2 + $0x18] sm:$0xff]
    %v599 = vld [vmem:[#allocation2 + $0x20] sm:$0xff]
    %v600 = vld [vmem:[#allocation2 + $0x28] sm:$0xff]
    %v601 = vld [vmem:[#allocation2 + $0x30] sm:$0xff]
    %v602 = vld [vmem:[#allocation2 + $0x38] sm:$0xff]
    %603 = vmatprep.subr.bf16.mxu0 0
    %604 = vmatpush1.bf16.msra.mxu0 %v595
    %605 = vmatprep.subr.bf16.mxu0 0
    %606 = vmatpush1.bf16.msra.mxu0 %v596
    %607 = vmatprep.subr.bf16.mxu0 0
    %608 = vmatpush1.bf16.msra.mxu0 %v597
    %609 = vmatprep.subr.bf16.mxu0 0
    %610 = vmatpush1.bf16.msra.mxu0 %v598
    %611 = vmatprep.subr.bf16.mxu0 0
    %612 = vmatpush1.bf16.msra.mxu0 %v599
    %613 = vmatprep.subr.bf16.mxu0 0
    %614 = vmatpush1.bf16.msra.mxu0 %v600
    %615 = vmatprep.subr.bf16.mxu0 0
    %616 = vmatpush1.bf16.msra.mxu0 %v601
    %617 = vmatprep.subr.bf16.mxu0 0
    %618 = vmatpush1.bf16.msra.mxu0 %v602
    %619 = vmatprep.subr.bf16.mxu0 0
    %620 = vmatpush1.bf16.msra.mxu0 0
    %621 = vmatprep.subr.bf16.mxu0 0
    %622 = vmatpush1.bf16.msra.mxu0 0
    %623 = vmatprep.subr.bf16.mxu0 0
    %624 = vmatpush1.bf16.msra.mxu0 0
    %625 = vmatprep.subr.bf16.mxu0 0
    %626 = vmatpush1.bf16.msra.mxu0 0
    %627 = vmatprep.subr.bf16.mxu0 0
    %628 = vmatpush1.bf16.msra.mxu0 0
    %629 = vmatprep.subr.bf16.mxu0 0
    %630 = vmatpush1.bf16.msra.mxu0 0
    %631 = vmatprep.subr.bf16.mxu0 0
    %632 = vmatpush1.bf16.msra.mxu0 0
    %633 = vmatprep.subr.bf16.mxu0 0
    %634 = vmatpush1.bf16.msra.mxu0 0
    %635 = vmatprep.mubr.bf16.mxu0 0
    %636 = vmatmul.mubr.bf16.gmra.mrb[0].mxu0 %v595
    %v637 = vpop.f32.mrb[0].mxu0
    %v638 = vadd.f32 0.0, %v637
    %v639 = vpop.f32.mrb[0].mxu0
    %v640 = vpop.f32.mrb[0].mxu0
    %v641 = vadd.f32 0.0, %v640
    %v642 = vpop.f32.mrb[0].mxu0
    %643 = vmatprep.mubr.bf16.mxu0 0
    %644 = vmatmul.mubr.bf16.gmra.mrb[0].mxu0 %v596
    %v645 = vpop.f32.mrb[0].mxu0
    %v646 = vadd.f32 0.0, %v645
    %v647 = vpop.f32.mrb[0].mxu0
    %v648 = vpop.f32.mrb[0].mxu0
    %v649 = vadd.f32 0.0, %v648
    %v650 = vpop.f32.mrb[0].mxu0
    %651 = vmatprep.mubr.bf16.mxu0 0
    %652 = vmatmul.mubr.bf16.gmra.mrb[0].mxu0 %v597
    %v653 = vpop.f32.mrb[0].mxu0
    %v654 = vadd.f32 0.0, %v653
    %v655 = vpop.f32.mrb[0].mxu0
    %v656 = vpop.f32.mrb[0].mxu0
    %v657 = vadd.f32 0.0, %v656
    %v658 = vpop.f32.mrb[0].mxu0
    %659 = vmatprep.mubr.bf16.mxu0 0
    %660 = vmatmul.mubr.bf16.gmra.mrb[0].mxu0 %v598
    %v661 = vpop.f32.mrb[0].mxu0
    %v662 = vadd.f32 0.0, %v661
    %v663 = vpop.f32.mrb[0].mxu0
    %v664 = vpop.f32.mrb[0].mxu0
    %v665 = vadd.f32 0.0, %v664
    %v666 = vpop.f32.mrb[0].mxu0
    %667 = vmatprep.mubr.bf16.mxu0 0
    %668 = vmatmul.mubr.bf16.gmra.mrb[0].mxu0 %v599
    %v669 = vpop.f32.mrb[0].mxu0
    %v670 = vadd.f32 0.0, %v669
    %v671 = vpop.f32.mrb[0].mxu0
    %v672 = vpop.f32.mrb[0].mxu0
    %v673 = vadd.f32 0.0, %v672
    %v674 = vpop.f32.mrb[0].mxu0
    %675 = vmatprep.mubr.bf16.mxu0 0
    %676 = vmatmul.mubr.bf16.gmra.mrb[0].mxu0 %v600
    %v677 = vpop.f32.mrb[0].mxu0
    %v678 = vadd.f32 0.0, %v677
    %v679 = vpop.f32.mrb[0].mxu0
    %v680 = vpop.f32.mrb[0].mxu0
    %v681 = vadd.f32 0.0, %v680
    %v682 = vpop.f32.mrb[0].mxu0
    %683 = vmatprep.mubr.bf16.mxu0 0
    %684 = vmatmul.mubr.bf16.gmra.mrb[0].mxu0 %v601
    %v685 = vpop.f32.mrb[0].mxu0
    %v686 = vadd.f32 0.0, %v685
    %v687 = vpop.f32.mrb[0].mxu0
    %v688 = vpop.f32.mrb[0].mxu0
    %v689 = vadd.f32 0.0, %v688
    %v690 = vpop.f32.mrb[0].mxu0
    %691 = vmatprep.mubr.bf16.mxu0 0
    %692 = vmatmul.mubr.bf16.gmra.mrb[0].mxu0 %v602
    %v693 = vpop.f32.mrb[0].mxu0
    %v694 = vadd.f32 0.0, %v693
    %v695 = vpop.f32.mrb[0].mxu0
    %v696 = vpop.f32.mrb[0].mxu0
    %v697 = vadd.f32 0.0, %v696
    %v698 = vpop.f32.mrb[0].mxu0
    %699 = vdwg.mxu0
    %vm700 = vcmp.gt.f32.partialorder %v638, 0.0
    %vm701 = vcmp.gt.f32.partialorder %v641, 0.0
    %vm702 = vcmp.gt.f32.partialorder %v646, 0.0
    %vm703 = vcmp.gt.f32.partialorder %v649, 0.0
    %vm704 = vcmp.gt.f32.partialorder %v654, 0.0
    %vm705 = vcmp.gt.f32.partialorder %v657, 0.0
    %vm706 = vcmp.gt.f32.partialorder %v662, 0.0
    %vm707 = vcmp.gt.f32.partialorder %v665, 0.0
    %vm708 = vcmp.gt.f32.partialorder %v670, 0.0
    %vm709 = vcmp.gt.f32.partialorder %v673, 0.0
    %vm710 = vcmp.gt.f32.partialorder %v678, 0.0
    %vm711 = vcmp.gt.f32.partialorder %v681, 0.0
    %vm712 = vcmp.gt.f32.partialorder %v686, 0.0
    %vm713 = vcmp.gt.f32.partialorder %v689, 0.0
    %vm714 = vcmp.gt.f32.partialorder %v694, 0.0
    %vm715 = vcmp.gt.f32.partialorder %v697, 0.0
    %v716 = vsel %vm700, 1.0, 0.0
    %v717 = vsel %vm701, 1.0, 0.0
    %v718 = vsel %vm702, 1.0, 0.0
    %v719 = vsel %vm703, 1.0, 0.0
    %v720 = vsel %vm704, 1.0, 0.0
    %v721 = vsel %vm705, 1.0, 0.0
    %v722 = vsel %vm706, 1.0, 0.0
    %v723 = vsel %vm707, 1.0, 0.0
    %v724 = vsel %vm708, 1.0, 0.0
    %v725 = vsel %vm709, 1.0, 0.0
    %v726 = vsel %vm710, 1.0, 0.0
    %v727 = vsel %vm711, 1.0, 0.0
    %v728 = vsel %vm712, 1.0, 0.0
    %v729 = vsel %vm713, 1.0, 0.0
    %v730 = vsel %vm714, 1.0, 0.0
    %v731 = vsel %vm715, 1.0, 0.0
    %v732 = vpack.c.bf16 %v717, %v716
    %v733 = vpack.c.bf16 %v719, %v718
    %v734 = vpack.c.bf16 %v721, %v720
    %v735 = vpack.c.bf16 %v723, %v722
    %v736 = vpack.c.bf16 %v725, %v724
    %v737 = vpack.c.bf16 %v727, %v726
    %v738 = vpack.c.bf16 %v729, %v728
    %v739 = vpack.c.bf16 %v731, %v730
    %740 = vst [vmem:[#allocation2] sm:$0xff] %v732
    %741 = vst [vmem:[#allocation2 + $0x8] sm:$0xff] %v733
    %742 = vst [vmem:[#allocation2 + $0x10] sm:$0xff] %v734
    %743 = vst [vmem:[#allocation2 + $0x18] sm:$0xff] %v735
    %744 = vst [vmem:[#allocation2 + $0x20] sm:$0xff] %v736
    %745 = vst [vmem:[#allocation2 + $0x28] sm:$0xff] %v737
    %746 = vst [vmem:[#allocation2 + $0x30] sm:$0xff] %v738
    %747 = vst [vmem:[#allocation2 + $0x38] sm:$0xff] %v739
    %v748 = vld [vmem:[#allocation2] sm:$0xff]
    %v749 = vld [vmem:[#allocation2 + $0x8] sm:$0xff]
    %v750 = vld [vmem:[#allocation2 + $0x10] sm:$0xff]
    %v751 = vld [vmem:[#allocation2 + $0x18] sm:$0xff]
    %v752 = vld [vmem:[#allocation2 + $0x20] sm:$0xff]
    %v753 = vld [vmem:[#allocation2 + $0x28] sm:$0xff]
    %v754 = vld [vmem:[#allocation2 + $0x30] sm:$0xff]
    %v755 = vld [vmem:[#allocation2 + $0x38] sm:$0xff]
    %756 = vmatprep.subr.bf16.mxu0 0
    %757 = vmatpush1.bf16.msra.mxu0 %v748
    %758 = vmatprep.subr.bf16.mxu0 0
    %759 = vmatpush1.bf16.msra.mxu0 %v749
    %760 = vmatprep.subr.bf16.mxu0 0
    %761 = vmatpush1.bf16.msra.mxu0 %v750
    %762 = vmatprep.subr.bf16.mxu0 0
    %763 = vmatpush1.bf16.msra.mxu0 %v751
    %764 = vmatprep.subr.bf16.mxu0 0
    %765 = vmatpush1.bf16.msra.mxu0 %v752
    %766 = vmatprep.subr.bf16.mxu0 0
    %767 = vmatpush1.bf16.msra.mxu0 %v753
    %768 = vmatprep.subr.bf16.mxu0 0
    %769 = vmatpush1.bf16.msra.mxu0 %v754
    %770 = vmatprep.subr.bf16.mxu0 0
    %771 = vmatpush1.bf16.msra.mxu0 %v755
    %772 = vmatprep.subr.bf16.mxu0 0
    %773 = vmatpush1.bf16.msra.mxu0 0
    %774 = vmatprep.subr.bf16.mxu0 0
    %775 = vmatpush1.bf16.msra.mxu0 0
    %776 = vmatprep.subr.bf16.mxu0 0
    %777 = vmatpush1.bf16.msra.mxu0 0
    %778 = vmatprep.subr.bf16.mxu0 0
    %779 = vmatpush1.bf16.msra.mxu0 0
    %780 = vmatprep.subr.bf16.mxu0 0
    %781 = vmatpush1.bf16.msra.mxu0 0
    %782 = vmatprep.subr.bf16.mxu0 0
    %783 = vmatpush1.bf16.msra.mxu0 0
    %784 = vmatprep.subr.bf16.mxu0 0
    %785 = vmatpush1.bf16.msra.mxu0 0
    %786 = vmatprep.subr.bf16.mxu0 0
    %787 = vmatpush1.bf16.msra.mxu0 0
    %788 = vmatprep.mubr.bf16.mxu0 0
    %789 = vmatmul.mubr.bf16.gmra.mrb[0].mxu0 %v748
    %v790 = vpop.f32.mrb[0].mxu0
    %v791 = vadd.f32 0.0, %v790
    %v792 = vpop.f32.mrb[0].mxu0
    %v793 = vpop.f32.mrb[0].mxu0
    %v794 = vadd.f32 0.0, %v793
    %v795 = vpop.f32.mrb[0].mxu0
    %796 = vmatprep.mubr.bf16.mxu0 0
    %797 = vmatmul.mubr.bf16.gmra.mrb[0].mxu0 %v749
    %v798 = vpop.f32.mrb[0].mxu0
    %v799 = vadd.f32 0.0, %v798
    %v800 = vpop.f32.mrb[0].mxu0
    %v801 = vpop.f32.mrb[0].mxu0
    %v802 = vadd.f32 0.0, %v801
    %v803 = vpop.f32.mrb[0].mxu0
    %804 = vmatprep.mubr.bf16.mxu0 0
    %805 = vmatmul.mubr.bf16.gmra.mrb[0].mxu0 %v750
    %v806 = vpop.f32.mrb[0].mxu0
    %v807 = vadd.f32 0.0, %v806
    %v808 = vpop.f32.mrb[0].mxu0
    %v809 = vpop.f32.mrb[0].mxu0
    %v810 = vadd.f32 0.0, %v809
    %v811 = vpop.f32.mrb[0].mxu0
    %812 = vmatprep.mubr.bf16.mxu0 0
    %813 = vmatmul.mubr.bf16.gmra.mrb[0].mxu0 %v751
    %v814 = vpop.f32.mrb[0].mxu0
    %v815 = vadd.f32 0.0, %v814
    %v816 = vpop.f32.mrb[0].mxu0
    %v817 = vpop.f32.mrb[0].mxu0
    %v818 = vadd.f32 0.0, %v817
    %v819 = vpop.f32.mrb[0].mxu0
    %820 = vmatprep.mubr.bf16.mxu0 0
    %821 = vmatmul.mubr.bf16.gmra.mrb[0].mxu0 %v752
    %v822 = vpop.f32.mrb[0].mxu0
    %v823 = vadd.f32 0.0, %v822
    %v824 = vpop.f32.mrb[0].mxu0
    %v825 = vpop.f32.mrb[0].mxu0
    %v826 = vadd.f32 0.0, %v825
    %v827 = vpop.f32.mrb[0].mxu0
    %828 = vmatprep.mubr.bf16.mxu0 0
    %829 = vmatmul.mubr.bf16.gmra.mrb[0].mxu0 %v753
    %v830 = vpop.f32.mrb[0].mxu0
    %v831 = vadd.f32 0.0, %v830
    %v832 = vpop.f32.mrb[0].mxu0
    %v833 = vpop.f32.mrb[0].mxu0
    %v834 = vadd.f32 0.0, %v833
    %v835 = vpop.f32.mrb[0].mxu0
    %836 = vmatprep.mubr.bf16.mxu0 0
    %837 = vmatmul.mubr.bf16.gmra.mrb[0].mxu0 %v754
    %v838 = vpop.f32.mrb[0].mxu0
    %v839 = vadd.f32 0.0, %v838
    %v840 = vpop.f32.mrb[0].mxu0
    %v841 = vpop.f32.mrb[0].mxu0
    %v842 = vadd.f32 0.0, %v841
    %v843 = vpop.f32.mrb[0].mxu0
    %844 = vmatprep.mubr.bf16.mxu0 0
    %845 = vmatmul.mubr.bf16.gmra.mrb[0].mxu0 %v755
    %v846 = vpop.f32.mrb[0].mxu0
    %v847 = vadd.f32 0.0, %v846
    %v848 = vpop.f32.mrb[0].mxu0
    %v849 = vpop.f32.mrb[0].mxu0
    %v850 = vadd.f32 0.0, %v849
    %v851 = vpop.f32.mrb[0].mxu0
    %852 = vdwg.mxu0
    %vm853 = vcmp.gt.f32.partialorder %v791, 0.0
    %vm854 = vcmp.gt.f32.partialorder %v794, 0.0
    %vm855 = vcmp.gt.f32.partialorder %v799, 0.0
    %vm856 = vcmp.gt.f32.partialorder %v802, 0.0
    %vm857 = vcmp.gt.f32.partialorder %v807, 0.0
    %vm858 = vcmp.gt.f32.partialorder %v810, 0.0
    %vm859 = vcmp.gt.f32.partialorder %v815, 0.0
    %vm860 = vcmp.gt.f32.partialorder %v818, 0.0
    %vm861 = vcmp.gt.f32.partialorder %v823, 0.0
    %vm862 = vcmp.gt.f32.partialorder %v826, 0.0
    %vm863 = vcmp.gt.f32.partialorder %v831, 0.0
    %vm864 = vcmp.gt.f32.partialorder %v834, 0.0
    %vm865 = vcmp.gt.f32.partialorder %v839, 0.0
    %vm866 = vcmp.gt.f32.partialorder %v842, 0.0
    %vm867 = vcmp.gt.f32.partialorder %v847, 0.0
    %vm868 = vcmp.gt.f32.partialorder %v850, 0.0
    %v869 = vsel %vm853, 1.0, 0.0
    %v870 = vsel %vm854, 1.0, 0.0
    %v871 = vsel %vm855, 1.0, 0.0
    %v872 = vsel %vm856, 1.0, 0.0
    %v873 = vsel %vm857, 1.0, 0.0
    %v874 = vsel %vm858, 1.0, 0.0
    %v875 = vsel %vm859, 1.0, 0.0
    %v876 = vsel %vm860, 1.0, 0.0
    %v877 = vsel %vm861, 1.0, 0.0
    %v878 = vsel %vm862, 1.0, 0.0
    %v879 = vsel %vm863, 1.0, 0.0
    %v880 = vsel %vm864, 1.0, 0.0
    %v881 = vsel %vm865, 1.0, 0.0
    %v882 = vsel %vm866, 1.0, 0.0
    %v883 = vsel %vm867, 1.0, 0.0
    %v884 = vsel %vm868, 1.0, 0.0
    %v885 = vpack.c.bf16 %v870, %v869
    %v886 = vpack.c.bf16 %v872, %v871
    %v887 = vpack.c.bf16 %v874, %v873
    %v888 = vpack.c.bf16 %v876, %v875
    %v889 = vpack.c.bf16 %v878, %v877
    %v890 = vpack.c.bf16 %v880, %v879
    %v891 = vpack.c.bf16 %v882, %v881
    %v892 = vpack.c.bf16 %v884, %v883
    %893 = vst [vmem:[#allocation2] sm:$0xff] %v885
    %894 = vst [vmem:[#allocation2 + $0x8] sm:$0xff] %v886
    %895 = vst [vmem:[#allocation2 + $0x10] sm:$0xff] %v887
    %896 = vst [vmem:[#allocation2 + $0x18] sm:$0xff] %v888
    %897 = vst [vmem:[#allocation2 + $0x20] sm:$0xff] %v889
    %898 = vst [vmem:[#allocation2 + $0x28] sm:$0xff] %v890
    %899 = vst [vmem:[#allocation2 + $0x30] sm:$0xff] %v891
    %900 = vst [vmem:[#allocation2 + $0x38] sm:$0xff] %v892
    %v901 = vld [vmem:[#allocation2] sm:$0xff]
    %v902 = vld [vmem:[#allocation2 + $0x8] sm:$0xff]
    %v903 = vld [vmem:[#allocation2 + $0x10] sm:$0xff]
    %v904 = vld [vmem:[#allocation2 + $0x18] sm:$0xff]
    %v905 = vld [vmem:[#allocation2 + $0x20] sm:$0xff]
    %v906 = vld [vmem:[#allocation2 + $0x28] sm:$0xff]
    %v907 = vld [vmem:[#allocation2 + $0x30] sm:$0xff]
    %v908 = vld [vmem:[#allocation2 + $0x38] sm:$0xff]
    %909 = vmatprep.subr.bf16.mxu0 0
    %910 = vmatpush1.bf16.msra.mxu0 %v901
    %911 = vmatprep.subr.bf16.mxu0 0
    %912 = vmatpush1.bf16.msra.mxu0 %v902
    %913 = vmatprep.subr.bf16.mxu0 0
    %914 = vmatpush1.bf16.msra.mxu0 %v903
    %915 = vmatprep.subr.bf16.mxu0 0
    %916 = vmatpush1.bf16.msra.mxu0 %v904
    %917 = vmatprep.subr.bf16.mxu0 0
    %918 = vmatpush1.bf16.msra.mxu0 %v905
    %919 = vmatprep.subr.bf16.mxu0 0
    %920 = vmatpush1.bf16.msra.mxu0 %v906
    %921 = vmatprep.subr.bf16.mxu0 0
    %922 = vmatpush1.bf16.msra.mxu0 %v907
    %923 = vmatprep.subr.bf16.mxu0 0
    %924 = vmatpush1.bf16.msra.mxu0 %v908
    %925 = vmatprep.subr.bf16.mxu0 0
    %926 = vmatpush1.bf16.msra.mxu0 0
    %927 = vmatprep.subr.bf16.mxu0 0
    %928 = vmatpush1.bf16.msra.mxu0 0
    %929 = vmatprep.subr.bf16.mxu0 0
    %930 = vmatpush1.bf16.msra.mxu0 0
    %931 = vmatprep.subr.bf16.mxu0 0
    %932 = vmatpush1.bf16.msra.mxu0 0
    %933 = vmatprep.subr.bf16.mxu0 0
    %934 = vmatpush1.bf16.msra.mxu0 0
    %935 = vmatprep.subr.bf16.mxu0 0
    %936 = vmatpush1.bf16.msra.mxu0 0
    %937 = vmatprep.subr.bf16.mxu0 0
    %938 = vmatpush1.bf16.msra.mxu0 0
    %939 = vmatprep.subr.bf16.mxu0 0
    %940 = vmatpush1.bf16.msra.mxu0 0
    %941 = vmatprep.mubr.bf16.mxu0 0
    %942 = vmatmul.mubr.bf16.gmra.mrb[0].mxu0 %v901
    %v943 = vpop.f32.mrb[0].mxu0
    %v944 = vadd.f32 0.0, %v943
    %v945 = vpop.f32.mrb[0].mxu0
    %v946 = vpop.f32.mrb[0].mxu0
    %v947 = vadd.f32 0.0, %v946
    %v948 = vpop.f32.mrb[0].mxu0
    %949 = vmatprep.mubr.bf16.mxu0 0
    %950 = vmatmul.mubr.bf16.gmra.mrb[0].mxu0 %v902
    %v951 = vpop.f32.mrb[0].mxu0
    %v952 = vadd.f32 0.0, %v951
    %v953 = vpop.f32.mrb[0].mxu0
    %v954 = vpop.f32.mrb[0].mxu0
    %v955 = vadd.f32 0.0, %v954
    %v956 = vpop.f32.mrb[0].mxu0
    %957 = vmatprep.mubr.bf16.mxu0 0
    %958 = vmatmul.mubr.bf16.gmra.mrb[0].mxu0 %v903
    %v959 = vpop.f32.mrb[0].mxu0
    %v960 = vadd.f32 0.0, %v959
    %v961 = vpop.f32.mrb[0].mxu0
    %v962 = vpop.f32.mrb[0].mxu0
    %v963 = vadd.f32 0.0, %v962
    %v964 = vpop.f32.mrb[0].mxu0
    %965 = vmatprep.mubr.bf16.mxu0 0
    %966 = vmatmul.mubr.bf16.gmra.mrb[0].mxu0 %v904
    %v967 = vpop.f32.mrb[0].mxu0
    %v968 = vadd.f32 0.0, %v967
    %v969 = vpop.f32.mrb[0].mxu0
    %v970 = vpop.f32.mrb[0].mxu0
    %v971 = vadd.f32 0.0, %v970
    %v972 = vpop.f32.mrb[0].mxu0
    %973 = vmatprep.mubr.bf16.mxu0 0
    %974 = vmatmul.mubr.bf16.gmra.mrb[0].mxu0 %v905
    %v975 = vpop.f32.mrb[0].mxu0
    %v976 = vadd.f32 0.0, %v975
    %v977 = vpop.f32.mrb[0].mxu0
    %v978 = vpop.f32.mrb[0].mxu0
    %v979 = vadd.f32 0.0, %v978
    %v980 = vpop.f32.mrb[0].mxu0
    %981 = vmatprep.mubr.bf16.mxu0 0
    %982 = vmatmul.mubr.bf16.gmra.mrb[0].mxu0 %v906
    %v983 = vpop.f32.mrb[0].mxu0
    %v984 = vadd.f32 0.0, %v983
    %v985 = vpop.f32.mrb[0].mxu0
    %v986 = vpop.f32.mrb[0].mxu0
    %v987 = vadd.f32 0.0, %v986
    %v988 = vpop.f32.mrb[0].mxu0
    %989 = vmatprep.mubr.bf16.mxu0 0
    %990 = vmatmul.mubr.bf16.gmra.mrb[0].mxu0 %v907
    %v991 = vpop.f32.mrb[0].mxu0
    %v992 = vadd.f32 0.0, %v991
    %v993 = vpop.f32.mrb[0].mxu0
    %v994 = vpop.f32.mrb[0].mxu0
    %v995 = vadd.f32 0.0, %v994
    %v996 = vpop.f32.mrb[0].mxu0
    %997 = vmatprep.mubr.bf16.mxu0 0
    %998 = vmatmul.mubr.bf16.gmra.mrb[0].mxu0 %v908
    %v999 = vpop.f32.mrb[0].mxu0
    %v1000 = vadd.f32 0.0, %v999
    %v1001 = vpop.f32.mrb[0].mxu0
    %v1002 = vpop.f32.mrb[0].mxu0
    %v1003 = vadd.f32 0.0, %v1002
    %v1004 = vpop.f32.mrb[0].mxu0
    %1005 = vdwg.mxu0
    %vm1006 = vcmp.gt.f32.partialorder %v944, 0.0
    %vm1007 = vcmp.gt.f32.partialorder %v947, 0.0
    %vm1008 = vcmp.gt.f32.partialorder %v952, 0.0
    %vm1009 = vcmp.gt.f32.partialorder %v955, 0.0
    %vm1010 = vcmp.gt.f32.partialorder %v960, 0.0
    %vm1011 = vcmp.gt.f32.partialorder %v963, 0.0
    %vm1012 = vcmp.gt.f32.partialorder %v968, 0.0
    %vm1013 = vcmp.gt.f32.partialorder %v971, 0.0
    %vm1014 = vcmp.gt.f32.partialorder %v976, 0.0
    %vm1015 = vcmp.gt.f32.partialorder %v979, 0.0
    %vm1016 = vcmp.gt.f32.partialorder %v984, 0.0
    %vm1017 = vcmp.gt.f32.partialorder %v987, 0.0
    %vm1018 = vcmp.gt.f32.partialorder %v992, 0.0
    %vm1019 = vcmp.gt.f32.partialorder %v995, 0.0
    %vm1020 = vcmp.gt.f32.partialorder %v1000, 0.0
    %vm1021 = vcmp.gt.f32.partialorder %v1003, 0.0
    %v1022 = vsel %vm1006, 1.0, 0.0
    %v1023 = vsel %vm1007, 1.0, 0.0
    %v1024 = vsel %vm1008, 1.0, 0.0
    %v1025 = vsel %vm1009, 1.0, 0.0
    %v1026 = vsel %vm1010, 1.0, 0.0
    %v1027 = vsel %vm1011, 1.0, 0.0
    %v1028 = vsel %vm1012, 1.0, 0.0
    %v1029 = vsel %vm1013, 1.0, 0.0
    %v1030 = vsel %vm1014, 1.0, 0.0
    %v1031 = vsel %vm1015, 1.0, 0.0
    %v1032 = vsel %vm1016, 1.0, 0.0
    %v1033 = vsel %vm1017, 1.0, 0.0
    %v1034 = vsel %vm1018, 1.0, 0.0
    %v1035 = vsel %vm1019, 1.0, 0.0
    %v1036 = vsel %vm1020, 1.0, 0.0
    %v1037 = vsel %vm1021, 1.0, 0.0
    %v1038 = vpack.c.bf16 %v1023, %v1022
    %v1039 = vpack.c.bf16 %v1025, %v1024
    %v1040 = vpack.c.bf16 %v1027, %v1026
    %v1041 = vpack.c.bf16 %v1029, %v1028
    %v1042 = vpack.c.bf16 %v1031, %v1030
    %v1043 = vpack.c.bf16 %v1033, %v1032
    %v1044 = vpack.c.bf16 %v1035, %v1034
    %v1045 = vpack.c.bf16 %v1037, %v1036
    %1046 = vst [vmem:[#allocation2] sm:$0xff] %v1038
    %1047 = vst [vmem:[#allocation2 + $0x8] sm:$0xff] %v1039
    %1048 = vst [vmem:[#allocation2 + $0x10] sm:$0xff] %v1040
    %1049 = vst [vmem:[#allocation2 + $0x18] sm:$0xff] %v1041
    %1050 = vst [vmem:[#allocation2 + $0x20] sm:$0xff] %v1042
    %1051 = vst [vmem:[#allocation2 + $0x28] sm:$0xff] %v1043
    %1052 = vst [vmem:[#allocation2 + $0x30] sm:$0xff] %v1044
    %1053 = vst [vmem:[#allocation2 + $0x38] sm:$0xff] %v1045
    %v1054 = vld [vmem:[#allocation2] sm:$0xff]
    %v1055 = vld [vmem:[#allocation2 + $0x8] sm:$0xff]
    %v1056 = vld [vmem:[#allocation2 + $0x10] sm:$0xff]
    %v1057 = vld [vmem:[#allocation2 + $0x18] sm:$0xff]
    %v1058 = vld [vmem:[#allocation2 + $0x20] sm:$0xff]
    %v1059 = vld [vmem:[#allocation2 + $0x28] sm:$0xff]
    %v1060 = vld [vmem:[#allocation2 + $0x30] sm:$0xff]
    %v1061 = vld [vmem:[#allocation2 + $0x38] sm:$0xff]
    %1062 = vmatprep.subr.bf16.mxu0 0
    %1063 = vmatpush1.bf16.msra.mxu0 %v1054
    %1064 = vmatprep.subr.bf16.mxu0 0
    %1065 = vmatpush1.bf16.msra.mxu0 %v1055
    %1066 = vmatprep.subr.bf16.mxu0 0
    %1067 = vmatpush1.bf16.msra.mxu0 %v1056
    %1068 = vmatprep.subr.bf16.mxu0 0
    %1069 = vmatpush1.bf16.msra.mxu0 %v1057
    %1070 = vmatprep.subr.bf16.mxu0 0
    %1071 = vmatpush1.bf16.msra.mxu0 %v1058
    %1072 = vmatprep.subr.bf16.mxu0 0
    %1073 = vmatpush1.bf16.msra.mxu0 %v1059
    %1074 = vmatprep.subr.bf16.mxu0 0
    %1075 = vmatpush1.bf16.msra.mxu0 %v1060
    %1076 = vmatprep.subr.bf16.mxu0 0
    %1077 = vmatpush1.bf16.msra.mxu0 %v1061
    %1078 = vmatprep.subr.bf16.mxu0 0
    %1079 = vmatpush1.bf16.msra.mxu0 0
    %1080 = vmatprep.subr.bf16.mxu0 0
    %1081 = vmatpush1.bf16.msra.mxu0 0
    %1082 = vmatprep.subr.bf16.mxu0 0
    %1083 = vmatpush1.bf16.msra.mxu0 0
    %1084 = vmatprep.subr.bf16.mxu0 0
    %1085 = vmatpush1.bf16.msra.mxu0 0
    %1086 = vmatprep.subr.bf16.mxu0 0
    %1087 = vmatpush1.bf16.msra.mxu0 0
    %1088 = vmatprep.subr.bf16.mxu0 0
    %1089 = vmatpush1.bf16.msra.mxu0 0
    %1090 = vmatprep.subr.bf16.mxu0 0
    %1091 = vmatpush1.bf16.msra.mxu0 0
    %1092 = vmatprep.subr.bf16.mxu0 0
    %1093 = vmatpush1.bf16.msra.mxu0 0
    %1094 = vmatprep.mubr.bf16.mxu0 0
    %1095 = vmatmul.mubr.bf16.gmra.mrb[0].mxu0 %v1054
    %v1096 = vpop.f32.mrb[0].mxu0
    %v1097 = vadd.f32 0.0, %v1096
    %v1098 = vpop.f32.mrb[0].mxu0
    %v1099 = vpop.f32.mrb[0].mxu0
    %v1100 = vadd.f32 0.0, %v1099
    %v1101 = vpop.f32.mrb[0].mxu0
    %1102 = vmatprep.mubr.bf16.mxu0 0
    %1103 = vmatmul.mubr.bf16.gmra.mrb[0].mxu0 %v1055
    %v1104 = vpop.f32.mrb[0].mxu0
    %v1105 = vadd.f32 0.0, %v1104
    %v1106 = vpop.f32.mrb[0].mxu0
    %v1107 = vpop.f32.mrb[0].mxu0
    %v1108 = vadd.f32 0.0, %v1107
    %v1109 = vpop.f32.mrb[0].mxu0
    %1110 = vmatprep.mubr.bf16.mxu0 0
    %1111 = vmatmul.mubr.bf16.gmra.mrb[0].mxu0 %v1056
    %v1112 = vpop.f32.mrb[0].mxu0
    %v1113 = vadd.f32 0.0, %v1112
    %v1114 = vpop.f32.mrb[0].mxu0
    %v1115 = vpop.f32.mrb[0].mxu0
    %v1116 = vadd.f32 0.0, %v1115
    %v1117 = vpop.f32.mrb[0].mxu0
    %1118 = vmatprep.mubr.bf16.mxu0 0
    %1119 = vmatmul.mubr.bf16.gmra.mrb[0].mxu0 %v1057
    %v1120 = vpop.f32.mrb[0].mxu0
    %v1121 = vadd.f32 0.0, %v1120
    %v1122 = vpop.f32.mrb[0].mxu0
    %v1123 = vpop.f32.mrb[0].mxu0
    %v1124 = vadd.f32 0.0, %v1123
    %v1125 = vpop.f32.mrb[0].mxu0
    %1126 = vmatprep.mubr.bf16.mxu0 0
    %1127 = vmatmul.mubr.bf16.gmra.mrb[0].mxu0 %v1058
    %v1128 = vpop.f32.mrb[0].mxu0
    %v1129 = vadd.f32 0.0, %v1128
    %v1130 = vpop.f32.mrb[0].mxu0
    %v1131 = vpop.f32.mrb[0].mxu0
    %v1132 = vadd.f32 0.0, %v1131
    %v1133 = vpop.f32.mrb[0].mxu0
    %1134 = vmatprep.mubr.bf16.mxu0 0
    %1135 = vmatmul.mubr.bf16.gmra.mrb[0].mxu0 %v1059
    %v1136 = vpop.f32.mrb[0].mxu0
    %v1137 = vadd.f32 0.0, %v1136
    %v1138 = vpop.f32.mrb[0].mxu0
    %v1139 = vpop.f32.mrb[0].mxu0
    %v1140 = vadd.f32 0.0, %v1139
    %v1141 = vpop.f32.mrb[0].mxu0
    %1142 = vmatprep.mubr.bf16.mxu0 0
    %1143 = vmatmul.mubr.bf16.gmra.mrb[0].mxu0 %v1060
    %v1144 = vpop.f32.mrb[0].mxu0
    %v1145 = vadd.f32 0.0, %v1144
    %v1146 = vpop.f32.mrb[0].mxu0
    %v1147 = vpop.f32.mrb[0].mxu0
    %v1148 = vadd.f32 0.0, %v1147
    %v1149 = vpop.f32.mrb[0].mxu0
    %1150 = vmatprep.mubr.bf16.mxu0 0
    %1151 = vmatmul.mubr.bf16.gmra.mrb[0].mxu0 %v1061
    %v1152 = vpop.f32.mrb[0].mxu0
    %v1153 = vadd.f32 0.0, %v1152
    %v1154 = vpop.f32.mrb[0].mxu0
    %v1155 = vpop.f32.mrb[0].mxu0
    %v1156 = vadd.f32 0.0, %v1155
    %v1157 = vpop.f32.mrb[0].mxu0
    %1158 = vdwg.mxu0
    %vm1159 = vcmp.gt.f32.partialorder %v1097, 0.0
    %vm1160 = vcmp.gt.f32.partialorder %v1100, 0.0
    %vm1161 = vcmp.gt.f32.partialorder %v1105, 0.0
    %vm1162 = vcmp.gt.f32.partialorder %v1108, 0.0
    %vm1163 = vcmp.gt.f32.partialorder %v1113, 0.0
    %vm1164 = vcmp.gt.f32.partialorder %v1116, 0.0
    %vm1165 = vcmp.gt.f32.partialorder %v1121, 0.0
    %vm1166 = vcmp.gt.f32.partialorder %v1124, 0.0
    %vm1167 = vcmp.gt.f32.partialorder %v1129, 0.0
    %vm1168 = vcmp.gt.f32.partialorder %v1132, 0.0
    %vm1169 = vcmp.gt.f32.partialorder %v1137, 0.0
    %vm1170 = vcmp.gt.f32.partialorder %v1140, 0.0
    %vm1171 = vcmp.gt.f32.partialorder %v1145, 0.0
    %vm1172 = vcmp.gt.f32.partialorder %v1148, 0.0
    %vm1173 = vcmp.gt.f32.partialorder %v1153, 0.0
    %vm1174 = vcmp.gt.f32.partialorder %v1156, 0.0
    %v1175 = vsel %vm1159, 1.0, 0.0
    %v1176 = vsel %vm1160, 1.0, 0.0
    %v1177 = vsel %vm1161, 1.0, 0.0
    %v1178 = vsel %vm1162, 1.0, 0.0
    %v1179 = vsel %vm1163, 1.0, 0.0
    %v1180 = vsel %vm1164, 1.0, 0.0
    %v1181 = vsel %vm1165, 1.0, 0.0
    %v1182 = vsel %vm1166, 1.0, 0.0
    %v1183 = vsel %vm1167, 1.0, 0.0
    %v1184 = vsel %vm1168, 1.0, 0.0
    %v1185 = vsel %vm1169, 1.0, 0.0
    %v1186 = vsel %vm1170, 1.0, 0.0
    %v1187 = vsel %vm1171, 1.0, 0.0
    %v1188 = vsel %vm1172, 1.0, 0.0
    %v1189 = vsel %vm1173, 1.0, 0.0
    %v1190 = vsel %vm1174, 1.0, 0.0
    %v1191 = vpack.c.bf16 %v1176, %v1175
    %v1192 = vpack.c.bf16 %v1178, %v1177
    %v1193 = vpack.c.bf16 %v1180, %v1179
    %v1194 = vpack.c.bf16 %v1182, %v1181
    %v1195 = vpack.c.bf16 %v1184, %v1183
    %v1196 = vpack.c.bf16 %v1186, %v1185
    %v1197 = vpack.c.bf16 %v1188, %v1187
    %v1198 = vpack.c.bf16 %v1190, %v1189
    %1199 = vst [vmem:[#allocation2] sm:$0xff] %v1191
    %1200 = vst [vmem:[#allocation2 + $0x8] sm:$0xff] %v1192
    %1201 = vst [vmem:[#allocation2 + $0x10] sm:$0xff] %v1193
    %1202 = vst [vmem:[#allocation2 + $0x18] sm:$0xff] %v1194
    %1203 = vst [vmem:[#allocation2 + $0x20] sm:$0xff] %v1195
    %1204 = vst [vmem:[#allocation2 + $0x28] sm:$0xff] %v1196
    %1205 = vst [vmem:[#allocation2 + $0x30] sm:$0xff] %v1197
    %1206 = vst [vmem:[#allocation2 + $0x38] sm:$0xff] %v1198
    %v1207 = vld [vmem:[#allocation2] sm:$0xff]
    %v1208 = vld [vmem:[#allocation2 + $0x8] sm:$0xff]
    %v1209 = vld [vmem:[#allocation2 + $0x10] sm:$0xff]
    %v1210 = vld [vmem:[#allocation2 + $0x18] sm:$0xff]
    %v1211 = vld [vmem:[#allocation2 + $0x20] sm:$0xff]
    %v1212 = vld [vmem:[#allocation2 + $0x28] sm:$0xff]
    %v1213 = vld [vmem:[#allocation2 + $0x30] sm:$0xff]
    %v1214 = vld [vmem:[#allocation2 + $0x38] sm:$0xff]
    %1215 = vmatprep.subr.bf16.mxu0 0
    %1216 = vmatpush1.bf16.msra.mxu0 %v1207
    %1217 = vmatprep.subr.bf16.mxu0 0
    %1218 = vmatpush1.bf16.msra.mxu0 %v1208
    %1219 = vmatprep.subr.bf16.mxu0 0
    %1220 = vmatpush1.bf16.msra.mxu0 %v1209
    %1221 = vmatprep.subr.bf16.mxu0 0
    %1222 = vmatpush1.bf16.msra.mxu0 %v1210
    %1223 = vmatprep.subr.bf16.mxu0 0
    %1224 = vmatpush1.bf16.msra.mxu0 %v1211
    %1225 = vmatprep.subr.bf16.mxu0 0
    %1226 = vmatpush1.bf16.msra.mxu0 %v1212
    %1227 = vmatprep.subr.bf16.mxu0 0
    %1228 = vmatpush1.bf16.msra.mxu0 %v1213
    %1229 = vmatprep.subr.bf16.mxu0 0
    %1230 = vmatpush1.bf16.msra.mxu0 %v1214
    %1231 = vmatprep.subr.bf16.mxu0 0
    %1232 = vmatpush1.bf16.msra.mxu0 0
    %1233 = vmatprep.subr.bf16.mxu0 0
    %1234 = vmatpush1.bf16.msra.mxu0 0
    %1235 = vmatprep.subr.bf16.mxu0 0
    %1236 = vmatpush1.bf16.msra.mxu0 0
    %1237 = vmatprep.subr.bf16.mxu0 0
    %1238 = vmatpush1.bf16.msra.mxu0 0
    %1239 = vmatprep.subr.bf16.mxu0 0
    %1240 = vmatpush1.bf16.msra.mxu0 0
    %1241 = vmatprep.subr.bf16.mxu0 0
    %1242 = vmatpush1.bf16.msra.mxu0 0
    %1243 = vmatprep.subr.bf16.mxu0 0
    %1244 = vmatpush1.bf16.msra.mxu0 0
    %1245 = vmatprep.subr.bf16.mxu0 0
    %1246 = vmatpush1.bf16.msra.mxu0 0
    %1247 = vmatprep.mubr.bf16.mxu0 0
    %1248 = vmatmul.mubr.bf16.gmra.mrb[0].mxu0 %v1207
    %v1249 = vpop.f32.mrb[0].mxu0
    %v1250 = vadd.f32 0.0, %v1249
    %v1251 = vpop.f32.mrb[0].mxu0
    %v1252 = vpop.f32.mrb[0].mxu0
    %v1253 = vadd.f32 0.0, %v1252
    %v1254 = vpop.f32.mrb[0].mxu0
    %1255 = vmatprep.mubr.bf16.mxu0 0
    %1256 = vmatmul.mubr.bf16.gmra.mrb[0].mxu0 %v1208
    %v1257 = vpop.f32.mrb[0].mxu0
    %v1258 = vadd.f32 0.0, %v1257
    %v1259 = vpop.f32.mrb[0].mxu0
    %v1260 = vpop.f32.mrb[0].mxu0
    %v1261 = vadd.f32 0.0, %v1260
    %v1262 = vpop.f32.mrb[0].mxu0
    %1263 = vmatprep.mubr.bf16.mxu0 0
    %1264 = vmatmul.mubr.bf16.gmra.mrb[0].mxu0 %v1209
    %v1265 = vpop.f32.mrb[0].mxu0
    %v1266 = vadd.f32 0.0, %v1265
    %v1267 = vpop.f32.mrb[0].mxu0
    %v1268 = vpop.f32.mrb[0].mxu0
    %v1269 = vadd.f32 0.0, %v1268
    %v1270 = vpop.f32.mrb[0].mxu0
    %1271 = vmatprep.mubr.bf16.mxu0 0
    %1272 = vmatmul.mubr.bf16.gmra.mrb[0].mxu0 %v1210
    %v1273 = vpop.f32.mrb[0].mxu0
    %v1274 = vadd.f32 0.0, %v1273
    %v1275 = vpop.f32.mrb[0].mxu0
    %v1276 = vpop.f32.mrb[0].mxu0
    %v1277 = vadd.f32 0.0, %v1276
    %v1278 = vpop.f32.mrb[0].mxu0
    %1279 = vmatprep.mubr.bf16.mxu0 0
    %1280 = vmatmul.mubr.bf16.gmra.mrb[0].mxu0 %v1211
    %v1281 = vpop.f32.mrb[0].mxu0
    %v1282 = vadd.f32 0.0, %v1281
    %v1283 = vpop.f32.mrb[0].mxu0
    %v1284 = vpop.f32.mrb[0].mxu0
    %v1285 = vadd.f32 0.0, %v1284
    %v1286 = vpop.f32.mrb[0].mxu0
    %1287 = vmatprep.mubr.bf16.mxu0 0
    %1288 = vmatmul.mubr.bf16.gmra.mrb[0].mxu0 %v1212
    %v1289 = vpop.f32.mrb[0].mxu0
    %v1290 = vadd.f32 0.0, %v1289
    %v1291 = vpop.f32.mrb[0].mxu0
    %v1292 = vpop.f32.mrb[0].mxu0
    %v1293 = vadd.f32 0.0, %v1292
    %v1294 = vpop.f32.mrb[0].mxu0
    %1295 = vmatprep.mubr.bf16.mxu0 0
    %1296 = vmatmul.mubr.bf16.gmra.mrb[0].mxu0 %v1213
    %v1297 = vpop.f32.mrb[0].mxu0
    %v1298 = vadd.f32 0.0, %v1297
    %v1299 = vpop.f32.mrb[0].mxu0
    %v1300 = vpop.f32.mrb[0].mxu0
    %v1301 = vadd.f32 0.0, %v1300
    %v1302 = vpop.f32.mrb[0].mxu0
    %1303 = vmatprep.mubr.bf16.mxu0 0
    %1304 = vmatmul.mubr.bf16.gmra.mrb[0].mxu0 %v1214
    %v1305 = vpop.f32.mrb[0].mxu0
    %v1306 = vadd.f32 0.0, %v1305
    %v1307 = vpop.f32.mrb[0].mxu0
    %v1308 = vpop.f32.mrb[0].mxu0
    %v1309 = vadd.f32 0.0, %v1308
    %v1310 = vpop.f32.mrb[0].mxu0
    %1311 = vdwg.mxu0
    %vm1312 = vcmp.gt.f32.partialorder %v1250, 0.0
    %vm1313 = vcmp.gt.f32.partialorder %v1253, 0.0
    %vm1314 = vcmp.gt.f32.partialorder %v1258, 0.0
    %vm1315 = vcmp.gt.f32.partialorder %v1261, 0.0
    %vm1316 = vcmp.gt.f32.partialorder %v1266, 0.0
    %vm1317 = vcmp.gt.f32.partialorder %v1269, 0.0
    %vm1318 = vcmp.gt.f32.partialorder %v1274, 0.0
    %vm1319 = vcmp.gt.f32.partialorder %v1277, 0.0
    %vm1320 = vcmp.gt.f32.partialorder %v1282, 0.0
    %vm1321 = vcmp.gt.f32.partialorder %v1285, 0.0
    %vm1322 = vcmp.gt.f32.partialorder %v1290, 0.0
    %vm1323 = vcmp.gt.f32.partialorder %v1293, 0.0
    %vm1324 = vcmp.gt.f32.partialorder %v1298, 0.0
    %vm1325 = vcmp.gt.f32.partialorder %v1301, 0.0
    %vm1326 = vcmp.gt.f32.partialorder %v1306, 0.0
    %vm1327 = vcmp.gt.f32.partialorder %v1309, 0.0
    %v1328 = vsel %vm1312, 1.0, 0.0
    %v1329 = vsel %vm1313, 1.0, 0.0
    %v1330 = vsel %vm1314, 1.0, 0.0
    %v1331 = vsel %vm1315, 1.0, 0.0
    %v1332 = vsel %vm1316, 1.0, 0.0
    %v1333 = vsel %vm1317, 1.0, 0.0
    %v1334 = vsel %vm1318, 1.0, 0.0
    %v1335 = vsel %vm1319, 1.0, 0.0
    %v1336 = vsel %vm1320, 1.0, 0.0
    %v1337 = vsel %vm1321, 1.0, 0.0
    %v1338 = vsel %vm1322, 1.0, 0.0
    %v1339 = vsel %vm1323, 1.0, 0.0
    %v1340 = vsel %vm1324, 1.0, 0.0
    %v1341 = vsel %vm1325, 1.0, 0.0
    %v1342 = vsel %vm1326, 1.0, 0.0
    %v1343 = vsel %vm1327, 1.0, 0.0
    %v1344 = vpack.c.bf16 %v1329, %v1328
    %v1345 = vpack.c.bf16 %v1331, %v1330
    %v1346 = vpack.c.bf16 %v1333, %v1332
    %v1347 = vpack.c.bf16 %v1335, %v1334
    %v1348 = vpack.c.bf16 %v1337, %v1336
    %v1349 = vpack.c.bf16 %v1339, %v1338
    %v1350 = vpack.c.bf16 %v1341, %v1340
    %v1351 = vpack.c.bf16 %v1343, %v1342
    %1352 = vst [vmem:[#allocation2] sm:$0xff] %v1344
    %1353 = vst [vmem:[#allocation2 + $0x8] sm:$0xff] %v1345
    %1354 = vst [vmem:[#allocation2 + $0x10] sm:$0xff] %v1346
    %1355 = vst [vmem:[#allocation2 + $0x18] sm:$0xff] %v1347
    %1356 = vst [vmem:[#allocation2 + $0x20] sm:$0xff] %v1348
    %1357 = vst [vmem:[#allocation2 + $0x28] sm:$0xff] %v1349
    %1358 = vst [vmem:[#allocation2 + $0x30] sm:$0xff] %v1350
    %1359 = vst [vmem:[#allocation2 + $0x38] sm:$0xff] %v1351
    %v1360 = vld [vmem:[#allocation2] sm:$0xff]
    %v1361 = vld [vmem:[#allocation2 + $0x8] sm:$0xff]
    %v1362 = vld [vmem:[#allocation2 + $0x10] sm:$0xff]
    %v1363 = vld [vmem:[#allocation2 + $0x18] sm:$0xff]
    %v1364 = vld [vmem:[#allocation2 + $0x20] sm:$0xff]
    %v1365 = vld [vmem:[#allocation2 + $0x28] sm:$0xff]
    %v1366 = vld [vmem:[#allocation2 + $0x30] sm:$0xff]
    %v1367 = vld [vmem:[#allocation2 + $0x38] sm:$0xff]
    %1368 = vmatprep.subr.bf16.mxu0 0
    %1369 = vmatpush1.bf16.msra.mxu0 %v1360
    %1370 = vmatprep.subr.bf16.mxu0 0
    %1371 = vmatpush1.bf16.msra.mxu0 %v1361
    %1372 = vmatprep.subr.bf16.mxu0 0
    %1373 = vmatpush1.bf16.msra.mxu0 %v1362
    %1374 = vmatprep.subr.bf16.mxu0 0
    %1375 = vmatpush1.bf16.msra.mxu0 %v1363
    %1376 = vmatprep.subr.bf16.mxu0 0
    %1377 = vmatpush1.bf16.msra.mxu0 %v1364
    %1378 = vmatprep.subr.bf16.mxu0 0
    %1379 = vmatpush1.bf16.msra.mxu0 %v1365
    %1380 = vmatprep.subr.bf16.mxu0 0
    %1381 = vmatpush1.bf16.msra.mxu0 %v1366
    %1382 = vmatprep.subr.bf16.mxu0 0
    %1383 = vmatpush1.bf16.msra.mxu0 %v1367
    %1384 = vmatprep.subr.bf16.mxu0 0
    %1385 = vmatpush1.bf16.msra.mxu0 0
    %1386 = vmatprep.subr.bf16.mxu0 0
    %1387 = vmatpush1.bf16.msra.mxu0 0
    %1388 = vmatprep.subr.bf16.mxu0 0
    %1389 = vmatpush1.bf16.msra.mxu0 0
    %1390 = vmatprep.subr.bf16.mxu0 0
    %1391 = vmatpush1.bf16.msra.mxu0 0
    %1392 = vmatprep.subr.bf16.mxu0 0
    %1393 = vmatpush1.bf16.msra.mxu0 0
    %1394 = vmatprep.subr.bf16.mxu0 0
    %1395 = vmatpush1.bf16.msra.mxu0 0
    %1396 = vmatprep.subr.bf16.mxu0 0
    %1397 = vmatpush1.bf16.msra.mxu0 0
    %1398 = vmatprep.subr.bf16.mxu0 0
    %1399 = vmatpush1.bf16.msra.mxu0 0
    %1400 = vmatprep.mubr.bf16.mxu0 0
    %1401 = vmatmul.mubr.bf16.gmra.mrb[0].mxu0 %v1360
    %v1402 = vpop.f32.mrb[0].mxu0
    %v1403 = vadd.f32 0.0, %v1402
    %v1404 = vpop.f32.mrb[0].mxu0
    %v1405 = vpop.f32.mrb[0].mxu0
    %v1406 = vadd.f32 0.0, %v1405
    %v1407 = vpop.f32.mrb[0].mxu0
    %1408 = vmatprep.mubr.bf16.mxu0 0
    %1409 = vmatmul.mubr.bf16.gmra.mrb[0].mxu0 %v1361
    %v1410 = vpop.f32.mrb[0].mxu0
    %v1411 = vadd.f32 0.0, %v1410
    %v1412 = vpop.f32.mrb[0].mxu0
    %v1413 = vpop.f32.mrb[0].mxu0
    %v1414 = vadd.f32 0.0, %v1413
    %v1415 = vpop.f32.mrb[0].mxu0
    %1416 = vmatprep.mubr.bf16.mxu0 0
    %1417 = vmatmul.mubr.bf16.gmra.mrb[0].mxu0 %v1362
    %v1418 = vpop.f32.mrb[0].mxu0
    %v1419 = vadd.f32 0.0, %v1418
    %v1420 = vpop.f32.mrb[0].mxu0
    %v1421 = vpop.f32.mrb[0].mxu0
    %v1422 = vadd.f32 0.0, %v1421
    %v1423 = vpop.f32.mrb[0].mxu0
    %1424 = vmatprep.mubr.bf16.mxu0 0
    %1425 = vmatmul.mubr.bf16.gmra.mrb[0].mxu0 %v1363
    %v1426 = vpop.f32.mrb[0].mxu0
    %v1427 = vadd.f32 0.0, %v1426
    %v1428 = vpop.f32.mrb[0].mxu0
    %v1429 = vpop.f32.mrb[0].mxu0
    %v1430 = vadd.f32 0.0, %v1429
    %v1431 = vpop.f32.mrb[0].mxu0
    %1432 = vmatprep.mubr.bf16.mxu0 0
    %1433 = vmatmul.mubr.bf16.gmra.mrb[0].mxu0 %v1364
    %v1434 = vpop.f32.mrb[0].mxu0
    %v1435 = vadd.f32 0.0, %v1434
    %v1436 = vpop.f32.mrb[0].mxu0
    %v1437 = vpop.f32.mrb[0].mxu0
    %v1438 = vadd.f32 0.0, %v1437
    %v1439 = vpop.f32.mrb[0].mxu0
    %1440 = vmatprep.mubr.bf16.mxu0 0
    %1441 = vmatmul.mubr.bf16.gmra.mrb[0].mxu0 %v1365
    %v1442 = vpop.f32.mrb[0].mxu0
    %v1443 = vadd.f32 0.0, %v1442
    %v1444 = vpop.f32.mrb[0].mxu0
    %v1445 = vpop.f32.mrb[0].mxu0
    %v1446 = vadd.f32 0.0, %v1445
    %v1447 = vpop.f32.mrb[0].mxu0
    %1448 = vmatprep.mubr.bf16.mxu0 0
    %1449 = vmatmul.mubr.bf16.gmra.mrb[0].mxu0 %v1366
    %v1450 = vpop.f32.mrb[0].mxu0
    %v1451 = vadd.f32 0.0, %v1450
    %v1452 = vpop.f32.mrb[0].mxu0
    %v1453 = vpop.f32.mrb[0].mxu0
    %v1454 = vadd.f32 0.0, %v1453
    %v1455 = vpop.f32.mrb[0].mxu0
    %1456 = vmatprep.mubr.bf16.mxu0 0
    %1457 = vmatmul.mubr.bf16.gmra.mrb[0].mxu0 %v1367
    %v1458 = vpop.f32.mrb[0].mxu0
    %v1459 = vadd.f32 0.0, %v1458
    %v1460 = vpop.f32.mrb[0].mxu0
    %v1461 = vpop.f32.mrb[0].mxu0
    %v1462 = vadd.f32 0.0, %v1461
    %v1463 = vpop.f32.mrb[0].mxu0
    %1464 = vdwg.mxu0
    %vm1465 = vcmp.gt.f32.partialorder %v1403, 0.0
    %vm1466 = vcmp.gt.f32.partialorder %v1406, 0.0
    %vm1467 = vcmp.gt.f32.partialorder %v1411, 0.0
    %vm1468 = vcmp.gt.f32.partialorder %v1414, 0.0
    %vm1469 = vcmp.gt.f32.partialorder %v1419, 0.0
    %vm1470 = vcmp.gt.f32.partialorder %v1422, 0.0
    %vm1471 = vcmp.gt.f32.partialorder %v1427, 0.0
    %vm1472 = vcmp.gt.f32.partialorder %v1430, 0.0
    %vm1473 = vcmp.gt.f32.partialorder %v1435, 0.0
    %vm1474 = vcmp.gt.f32.partialorder %v1438, 0.0
    %vm1475 = vcmp.gt.f32.partialorder %v1443, 0.0
    %vm1476 = vcmp.gt.f32.partialorder %v1446, 0.0
    %vm1477 = vcmp.gt.f32.partialorder %v1451, 0.0
    %vm1478 = vcmp.gt.f32.partialorder %v1454, 0.0
    %vm1479 = vcmp.gt.f32.partialorder %v1459, 0.0
    %vm1480 = vcmp.gt.f32.partialorder %v1462, 0.0
    %v1481 = vsel %vm1465, 1.0, 0.0
    %v1482 = vsel %vm1466, 1.0, 0.0
    %v1483 = vsel %vm1467, 1.0, 0.0
    %v1484 = vsel %vm1468, 1.0, 0.0
    %v1485 = vsel %vm1469, 1.0, 0.0
    %v1486 = vsel %vm1470, 1.0, 0.0
    %v1487 = vsel %vm1471, 1.0, 0.0
    %v1488 = vsel %vm1472, 1.0, 0.0
    %v1489 = vsel %vm1473, 1.0, 0.0
    %v1490 = vsel %vm1474, 1.0, 0.0
    %v1491 = vsel %vm1475, 1.0, 0.0
    %v1492 = vsel %vm1476, 1.0, 0.0
    %v1493 = vsel %vm1477, 1.0, 0.0
    %v1494 = vsel %vm1478, 1.0, 0.0
    %v1495 = vsel %vm1479, 1.0, 0.0
    %v1496 = vsel %vm1480, 1.0, 0.0
    %v1497 = vpack.c.bf16 %v1482, %v1481
    %v1498 = vpack.c.bf16 %v1484, %v1483
    %v1499 = vpack.c.bf16 %v1486, %v1485
    %v1500 = vpack.c.bf16 %v1488, %v1487
    %v1501 = vpack.c.bf16 %v1490, %v1489
    %v1502 = vpack.c.bf16 %v1492, %v1491
    %v1503 = vpack.c.bf16 %v1494, %v1493
    %v1504 = vpack.c.bf16 %v1496, %v1495
    %1505 = vst [vmem:[#allocation2] sm:$0xff] %v1497
    %1506 = vst [vmem:[#allocation2 + $0x8] sm:$0xff] %v1498
    %1507 = vst [vmem:[#allocation2 + $0x10] sm:$0xff] %v1499
    %1508 = vst [vmem:[#allocation2 + $0x18] sm:$0xff] %v1500
    %1509 = vst [vmem:[#allocation2 + $0x20] sm:$0xff] %v1501
    %1510 = vst [vmem:[#allocation2 + $0x28] sm:$0xff] %v1502
    %1511 = vst [vmem:[#allocation2 + $0x30] sm:$0xff] %v1503
    %1512 = vst [vmem:[#allocation2 + $0x38] sm:$0xff] %v1504
    %v1513 = vld [vmem:[#allocation2] sm:$0xff]
    %v1514 = vld [vmem:[#allocation2 + $0x8] sm:$0xff]
    %v1515 = vld [vmem:[#allocation2 + $0x10] sm:$0xff]
    %v1516 = vld [vmem:[#allocation2 + $0x18] sm:$0xff]
    %v1517 = vld [vmem:[#allocation2 + $0x20] sm:$0xff]
    %v1518 = vld [vmem:[#allocation2 + $0x28] sm:$0xff]
    %v1519 = vld [vmem:[#allocation2 + $0x30] sm:$0xff]
    %v1520 = vld [vmem:[#allocation2 + $0x38] sm:$0xff]
    %v1521 = vunpack.c.l.bf16 %v1513
    %v1522 = vunpack.c.h.bf16 %v1513
    %v1523 = vunpack.c.l.bf16 %v1514
    %v1524 = vunpack.c.h.bf16 %v1514
    %v1525 = vunpack.c.l.bf16 %v1515
    %v1526 = vunpack.c.h.bf16 %v1515
    %v1527 = vunpack.c.l.bf16 %v1516
    %v1528 = vunpack.c.h.bf16 %v1516
    %v1529 = vunpack.c.l.bf16 %v1517
    %v1530 = vunpack.c.h.bf16 %v1517
    %v1531 = vunpack.c.l.bf16 %v1518
    %v1532 = vunpack.c.h.bf16 %v1518
    %v1533 = vunpack.c.l.bf16 %v1519
    %v1534 = vunpack.c.h.bf16 %v1519
    %v1535 = vunpack.c.l.bf16 %v1520
    %v1536 = vunpack.c.h.bf16 %v1520
    %v1537 = vlaneseq
    %v1538 = vshrl.u32 %v1537, 7
    %v1539 = vadd.s32 %v1538, 8
    %v1540 = vadd.s32 %v1538, 16
    %v1541 = vadd.s32 %v1538, 24
    %v1542 = vadd.s32 %v1538, 32
    %v1543 = vadd.s32 %v1538, 40
    %v1544 = vadd.s32 %v1538, 48
    %v1545 = vadd.s32 %v1538, 56
    %v1546 = vadd.s32 %v1538, 64
    %v1547 = vadd.s32 %v1538, 72
    %v1548 = vadd.s32 %v1538, 80
    %v1549 = vadd.s32 %v1538, 88
    %v1550 = vadd.s32 %v1538, 96
    %v1551 = vadd.s32 %v1538, 104
    %v1552 = vadd.s32 %v1538, 112
    %v1553 = vadd.s32 %v1538, 120
    %v1554 = vcvt.s32.f32 %v1538
    %v1555 = vcvt.s32.f32 %v1539
    %v1556 = vcvt.s32.f32 %v1540
    %v1557 = vcvt.s32.f32 %v1541
    %v1558 = vcvt.s32.f32 %v1542
    %v1559 = vcvt.s32.f32 %v1543
    %v1560 = vcvt.s32.f32 %v1544
    %v1561 = vcvt.s32.f32 %v1545
    %v1562 = vcvt.s32.f32 %v1546
    %v1563 = vcvt.s32.f32 %v1547
    %v1564 = vcvt.s32.f32 %v1548
    %v1565 = vcvt.s32.f32 %v1549
    %v1566 = vcvt.s32.f32 %v1550
    %v1567 = vcvt.s32.f32 %v1551
    %v1568 = vcvt.s32.f32 %v1552
    %v1569 = vcvt.s32.f32 %v1553
    %vm1570 = vcmp.gt.f32.partialorder %v1521, 0.0
    %vm1571 = vcmp.gt.f32.partialorder %v1522, 0.0
    %vm1572 = vcmp.gt.f32.partialorder %v1523, 0.0
    %vm1573 = vcmp.gt.f32.partialorder %v1524, 0.0
    %vm1574 = vcmp.gt.f32.partialorder %v1525, 0.0
    %vm1575 = vcmp.gt.f32.partialorder %v1526, 0.0
    %vm1576 = vcmp.gt.f32.partialorder %v1527, 0.0
    %vm1577 = vcmp.gt.f32.partialorder %v1528, 0.0
    %vm1578 = vcmp.gt.f32.partialorder %v1529, 0.0
    %vm1579 = vcmp.gt.f32.partialorder %v1530, 0.0
    %vm1580 = vcmp.gt.f32.partialorder %v1531, 0.0
    %vm1581 = vcmp.gt.f32.partialorder %v1532, 0.0
    %vm1582 = vcmp.gt.f32.partialorder %v1533, 0.0
    %vm1583 = vcmp.gt.f32.partialorder %v1534, 0.0
    %vm1584 = vcmp.gt.f32.partialorder %v1535, 0.0
    %vm1585 = vcmp.gt.f32.partialorder %v1536, 0.0
    %v1586 = vsel %vm1570, %v1554, 128.0
    %v1587 = vsel %vm1571, %v1555, 128.0
    %v1588 = vsel %vm1572, %v1556, 128.0
    %v1589 = vsel %vm1573, %v1557, 128.0
    %v1590 = vsel %vm1574, %v1558, 128.0
    %v1591 = vsel %vm1575, %v1559, 128.0
    %v1592 = vsel %vm1576, %v1560, 128.0
    %v1593 = vsel %vm1577, %v1561, 128.0
    %v1594 = vsel %vm1578, %v1562, 128.0
    %v1595 = vsel %vm1579, %v1563, 128.0
    %v1596 = vsel %vm1580, %v1564, 128.0
    %v1597 = vsel %vm1581, %v1565, 128.0
    %v1598 = vsel %vm1582, %v1566, 128.0
    %v1599 = vsel %vm1583, %v1567, 128.0
    %v1600 = vsel %vm1584, %v1568, 128.0
    %v1601 = vsel %vm1585, %v1569, 128.0
    %v1602 = vmin.f32 %v1586, %v1590
    %v1603 = vmin.f32 %v1587, %v1591
    %v1604 = vmin.f32 %v1588, %v1592
    %v1605 = vmin.f32 %v1589, %v1593
    %v1606 = vmin.f32 %v1602, %v1594
    %v1607 = vmin.f32 %v1603, %v1595
    %v1608 = vmin.f32 %v1604, %v1596
    %v1609 = vmin.f32 %v1605, %v1597
    %v1610 = vmin.f32 %v1606, %v1598
    %v1611 = vmin.f32 %v1607, %v1599
    %v1612 = vmin.f32 %v1608, %v1600
    %v1613 = vmin.f32 %v1609, %v1601
    %v1614 = vmin.f32 %v1610, %v1611
    %v1615 = vmin.f32 %v1612, %v1613
    %v1616 = vmin.f32 %v1614, %v1615
    %v1617 = vrot.slane %v1616, 4
    %v1618 = vmin.f32 %v1616, %v1617
    %v1619 = vrot.slane %v1618, 2
    %v1620 = vmin.f32 %v1618, %v1619
    %v1621 = vrot.slane %v1620, 1
    %v1622 = vmin.f32 %v1620, %v1621
    %v1623 = vmin.f32 %v1622, 128.0
    %v1624 = vcvt.f32.s32.to.zero.pseudo %v1623
    %1625 = vst [vmem:[#allocation3] sm:$0x1] %v1624
    // Predicated region
    $region10: #{tpu_custom_call.1} parent=1 // pred_check
      _
    $region11: #{tpu_custom_call.1} parent=1 // pred_check_branch
      %1627 = sbr.rel (0) target = $region13
    $region12: #{tpu_custom_call.1} parent=1 // pred_region
      %s1629 = ssub.s32 16, 16
      %1630 = vsyncadd [#allocation4], %s1629
      %s1632 = sshll.u32 [#allocation3], 4
      %s1633 = int_to_ptr.vmem [resolvable:$true] %s1632
      %1635 = dma.vmem_to_hbm [thread:$0]  %s1633, 16, %s2, [#allocation4]
    $region13: #{tpu_custom_call.1} parent=1 // pred_fallthru
      _
    // Predicated region
    $region14: #{tpu_custom_call.1} parent=1 // pred_check
      _
    $region15: #{tpu_custom_call.1} parent=1 // pred_check_branch
      %1637 = sbr.rel (0) target = $region17
    $region16: #{tpu_custom_call.1} parent=1 // pred_region
      %1638 = dma.done [#allocation4], 16
    $region17: #{tpu_custom_call.1} parent=1 // pred_fallthru
      _
    %1639 = vsyncpa [#allocation4], 1

</llo_original>
